<compile_context>
chip_gen: v6e
topology: v6e:2x2x1
jax: 0.10.0
libtpu: 0.0.40
codegen_flags: <defaults>
</compile_context>

<pallas_src>
import functools

import jax
import jax.numpy as jnp
from jax.experimental import pallas as pl
from jax.experimental.pallas import tpu as pltpu


def _decoder_kernel(xT_ref, w1_ref, b1_ref, w2_ref, b2_ref, o_ref, *,
                    hc, compute_dtype):
    """y^T = W2 @ tanh(W1 @ x^T + b1) + b2, rows on lanes, hidden chunked."""
    latent = xT_ref.shape[0]
    hidden_p = w1_ref.shape[0]          # padded to a multiple of hc
    bc = xT_ref.shape[1]
    n_chunks = hidden_p // hc

    # Hoist the x-row sublane broadcasts out of the chunk loop
    # (JAX does not CSE broadcast_in_dim).
    xb = [jnp.broadcast_to(xT_ref[k:k + 1, :].astype(compute_dtype), (hc, bc))
          for k in range(latent)]

    # Layer-2 result accumulated chunk-wise in vregs; single sublane reduce at
    # the end instead of one XLU reduce (and one temporary) per chunk.
    acc = jnp.zeros((hc, bc), jnp.float32)

    # Fully unrolled hidden-chunk loop: per-chunk working set is (hc, bc)
    # (= 8 vregs at bc=1024) -> everything stays in vregs, no VMEM round-trips.
    for c in range(n_chunks):
        lo = c * hc
        w1c = w1_ref[lo:lo + hc, :].astype(compute_dtype)   # (hc, latent)
        b1c = b1_ref[lo:lo + hc, :].astype(compute_dtype)   # (hc, 1)
        w2c = w2_ref[lo:lo + hc, :].astype(jnp.float32)     # (hc, 1)

        # Layer 1: K = latent is tiny -> unrolled broadcast-FMA on the VPU.
        pre = jnp.broadcast_to(b1c, (hc, bc))
        for k in range(latent):
            pre = pre + w1c[:, k:k + 1] * xb[k]             # (hc, bc)
        h = jnp.tanh(pre)                                   # (hc, bc)  EUP

        # Layer 2 partial: weight by W2 rows, accumulate in f32.
        acc = acc + h.astype(jnp.float32) * w2c             # (hc, bc)

    y = jnp.sum(acc, axis=0, keepdims=True)                 # (1, bc)  XLU once
    y = y + b2_ref[...].astype(jnp.float32)                 # (1, 1) broadcast
    o_ref[...] = y.astype(o_ref.dtype)


@functools.partial(jax.jit, static_argnames=("block_cols", "compute_dtype"))
def decoder_forward(z, params, *, block_cols=1024, compute_dtype=jnp.float32):
    """z: [..., latent_dim] -> [..., 1].  Params use PyTorch nn.Linear shapes.

    compute_dtype=jnp.bfloat16 is an opt-in fast path for v6e/v7x (bf16
    VALU/EUP); it lowers the hidden-activation precision, so only use it when
    bf16-level accuracy is acceptable.  Layer-2 accumulation is always f32.
    """
    w1 = params["w1"]          # (hidden, latent)  == fc1.weight
    b1 = params["b1"]          # (hidden,)         == fc1.bias
    w2 = params["w2"]          # (1, hidden)       == fc2.weight
    b2 = params["b2"]          # (1,)              == fc2.bias
    hidden, latent = w1.shape
    assert z.shape[-1] == latent

    lead = z.shape[:-1]
    rows = 1
    for d in lead:
        rows *= d

    # Lane-dense layout: rows on lanes.  One cheap XLA transpose pass over z
    # (latent=2 -> 16 B/row); the kernel itself is tanh(EUP)/VALU-bound.
    xT = z.reshape(rows, latent).T                           # (latent, rows)

    # Column tile: multiple of 128 (or == rows when rows < 128) so every
    # BlockSpec satisfies the (8,128) rule with no whole-array pad copy.
    block_cols = max(128, (block_cols // 128) * 128)
    if rows < 128:
        bc = rows
    else:
        bc = min(block_cols, (rows // 128) * 128)
    grid = (pl.cdiv(rows, bc),)

    # Pad hidden to a multiple of the chunk height with zero rows (zero W1/b1
    # rows -> tanh(0)=0, zero W2 entries -> contribute nothing).
    hc = 8
    h_pad = ((hidden + hc - 1) // hc) * hc
    pad = h_pad - hidden
    w1_p = jnp.pad(w1, ((0, pad), (0, 0))) if pad else w1
    b1_c = jnp.pad(b1, ((0, pad),)).reshape(h_pad, 1) if pad else b1.reshape(hidden, 1)
    w2_c = jnp.pad(w2.reshape(hidden, 1), ((0, pad), (0, 0))) if pad else w2.reshape(hidden, 1)
    b2_c = b2.reshape(1, 1)

    resident = lambda i: (0, 0)        # weights/biases stay in VMEM across grid

    itemsize = jnp.dtype(z.dtype).itemsize
    cost = pl.CostEstimate(
        flops=2 * rows * hidden * (latent + 1),
        transcendentals=rows * hidden,
        bytes_accessed=rows * (latent + 1) * itemsize
                       + (h_pad * (latent + 2) + 1) * 4,
    )

    kernel = functools.partial(_decoder_kernel, hc=hc,
                               compute_dtype=compute_dtype)

    out = pl.pallas_call(
        kernel,
        out_shape=jax.ShapeDtypeStruct((1, rows), z.dtype),
        grid_spec=pltpu.PrefetchScalarGridSpec(
            num_scalar_prefetch=0,
            grid=grid,
            in_specs=[
                pl.BlockSpec((latent, bc), lambda i: (0, i)),   # x^T tile
                pl.BlockSpec((h_pad, latent), resident),        # W1
                pl.BlockSpec((h_pad, 1), resident),             # b1
                pl.BlockSpec((h_pad, 1), resident),             # W2 (column)
                pl.BlockSpec((1, 1), resident),                 # b2
            ],
            out_specs=pl.BlockSpec((1, bc), lambda i: (0, i)),
        ),
        compiler_params=pltpu.CompilerParams(
            # Row-block grid shards across TensorCores (v7x megacore).
            dimension_semantics=("parallel",),
            # Peak VMEM is just the double-buffered I/O tiles + weights
            # (< 100 KiB at bc=1024) -> no vmem_limit_bytes needed anywhere.
        ),
        cost_estimate=cost,
    )(xT, w1_p, b1_c, w2_c, b2_c)

    # (1, rows) -> (*lead, 1) is a free reshape (identical memory order).
    return out.reshape(*lead, 1)


def init_params(key, latent_dim=2, hidden=200, dtype=jnp.float32):
    """nn.Linear-style init with PyTorch weight shapes (out, in)."""
    k1, k2, k3, k4 = jax.random.split(key, 4)

    def lin(kw, kb, fan_in, fan_out):
        bound = 1.0 / float(fan_in) ** 0.5
        w = jax.random.uniform(kw, (fan_out, fan_in), dtype, -bound, bound)
        b = jax.random.uniform(kb, (fan_out,), dtype, -bound, bound)
        return w, b

    w1, b1 = lin(k1, k2, latent_dim, hidden)   # fc1: latent -> hidden
    w2, b2 = lin(k3, k4, hidden, 1)            # fc2: hidden -> 1
    return {"w1": w1, "b1": b1, "w2": w2, "b2": b2}


def _reference(z, p):
    hi = jax.lax.Precision.HIGHEST
    h = jnp.tanh(jnp.dot(z, p["w1"].T, precision=hi) + p["b1"])
    return jnp.dot(h, p["w2"].T, precision=hi) + p["b2"]


if __name__ == "__main__":
    latent_dim = 2
    hidden = 200
    batch, seq = 2, 150        # rows = 300 -> 2 grid steps incl. ragged tail

    key = jax.random.PRNGKey(0)
    kz, kp = jax.random.split(key)
    z = jax.random.normal(kz, (batch, seq, latent_dim), dtype=jnp.float32)
    params = init_params(kp, latent_dim, hidden)

    y = decoder_forward(z, params)
    y = jax.block_until_ready(y)

    y_ref = _reference(z, params)
    assert y.shape == (batch, seq, 1)
    assert jnp.allclose(y, y_ref, atol=2e-5, rtol=2e-5), float(
        jnp.max(jnp.abs(y - y_ref)))
    print("KERNEL_OK")
</pallas_src>

<mosaic_0001>
module attributes {stable_mosaic.version = 11 : i64} {
  func.func @_decoder_kernel(%arg0: i32, %arg1: memref<2x256xf32, #tpu.memory_space<vmem>>, %arg2: memref<200x2xf32, #tpu.memory_space<vmem>>, %arg3: memref<200x1xf32, #tpu.memory_space<vmem>>, %arg4: memref<200x1xf32, #tpu.memory_space<vmem>>, %arg5: memref<1x1xf32, #tpu.memory_space<vmem>>, %arg6: memref<1x256xf32, #tpu.memory_space<vmem>>) attributes {dimension_semantics = [#tpu.dimension_semantics<parallel>], iteration_bounds = array<i64: 2>, scalar_prefetch = 0 : i64, scratch_operands = 0 : i64, tpu.core_type = #tpu.core_type<tc>, window_params = [{transform_indices = @transform_0, window_bounds = array<i64: 2, 256>}, {pipeline_mode = #tpu.pipeline_mode<synchronous>, transform_indices = @transform_1, window_bounds = array<i64: 200, 2>}, {pipeline_mode = #tpu.pipeline_mode<synchronous>, transform_indices = @transform_2, window_bounds = array<i64: 200, 1>}, {pipeline_mode = #tpu.pipeline_mode<synchronous>, transform_indices = @transform_3, window_bounds = array<i64: 200, 1>}, {pipeline_mode = #tpu.pipeline_mode<synchronous>, transform_indices = @transform_4, window_bounds = array<i64: 1, 1>}, {transform_indices = @transform_5, window_bounds = array<i64: 1, 256>}]} {
    %c0 = arith.constant 0 : index
    %c0_0 = arith.constant 0 : index
    %0 = vector.load %arg1[%c0, %c0_0] : memref<2x256xf32, #tpu.memory_space<vmem>>, vector<1x256xf32>
    %1 = vector.shape_cast %0 : vector<1x256xf32> to vector<1x256xf32>
    %2 = vector.broadcast %1 : vector<1x256xf32> to vector<8x256xf32>
    %c1 = arith.constant 1 : index
    %c0_1 = arith.constant 0 : index
    %3 = vector.load %arg1[%c1, %c0_1] : memref<2x256xf32, #tpu.memory_space<vmem>>, vector<1x256xf32>
    %4 = vector.shape_cast %3 : vector<1x256xf32> to vector<1x256xf32>
    %5 = vector.broadcast %4 : vector<1x256xf32> to vector<8x256xf32>
    %cst = arith.constant 0.000000e+00 : f32
    %6 = vector.broadcast %cst : f32 to vector<8x256xf32>
    %c0_2 = arith.constant 0 : index
    %c0_3 = arith.constant 0 : index
    %7 = vector.load %arg2[%c0_2, %c0_3] : memref<200x2xf32, #tpu.memory_space<vmem>>, vector<8x2xf32>
    %c0_4 = arith.constant 0 : index
    %c0_5 = arith.constant 0 : index
    %8 = vector.load %arg3[%c0_4, %c0_5] : memref<200x1xf32, #tpu.memory_space<vmem>>, vector<8x1xf32>
    %c0_6 = arith.constant 0 : index
    %c0_7 = arith.constant 0 : index
    %9 = vector.load %arg4[%c0_6, %c0_7] : memref<200x1xf32, #tpu.memory_space<vmem>>, vector<8x1xf32>
    %10 = vector.shape_cast %8 : vector<8x1xf32> to vector<8x1xf32>
    %11 = vector.broadcast %10 : vector<8x1xf32> to vector<8x256xf32>
    %12 = vector.extract_strided_slice %7 {offsets = [0, 0], sizes = [8, 1], strides = [1, 1]} : vector<8x2xf32> to vector<8x1xf32>
    %13 = vector.broadcast %12 : vector<8x1xf32> to vector<8x256xf32>
    %14 = arith.mulf %13, %2 : vector<8x256xf32>
    %15 = arith.addf %11, %14 : vector<8x256xf32>
    %16 = vector.extract_strided_slice %7 {offsets = [0, 1], sizes = [8, 1], strides = [1, 1]} : vector<8x2xf32> to vector<8x1xf32>
    %17 = vector.broadcast %16 : vector<8x1xf32> to vector<8x256xf32>
    %18 = arith.mulf %17, %5 : vector<8x256xf32>
    %19 = arith.addf %15, %18 : vector<8x256xf32>
    %20 = math.tanh %19 : vector<8x256xf32>
    %21 = vector.broadcast %9 : vector<8x1xf32> to vector<8x256xf32>
    %22 = arith.mulf %20, %21 : vector<8x256xf32>
    %23 = arith.addf %6, %22 : vector<8x256xf32>
    %c8 = arith.constant 8 : index
    %c0_8 = arith.constant 0 : index
    %24 = vector.load %arg2[%c8, %c0_8] : memref<200x2xf32, #tpu.memory_space<vmem>>, vector<8x2xf32>
    %c8_9 = arith.constant 8 : index
    %c0_10 = arith.constant 0 : index
    %25 = vector.load %arg3[%c8_9, %c0_10] : memref<200x1xf32, #tpu.memory_space<vmem>>, vector<8x1xf32>
    %c8_11 = arith.constant 8 : index
    %c0_12 = arith.constant 0 : index
    %26 = vector.load %arg4[%c8_11, %c0_12] : memref<200x1xf32, #tpu.memory_space<vmem>>, vector<8x1xf32>
    %27 = vector.shape_cast %25 : vector<8x1xf32> to vector<8x1xf32>
    %28 = vector.broadcast %27 : vector<8x1xf32> to vector<8x256xf32>
    %29 = vector.extract_strided_slice %24 {offsets = [0, 0], sizes = [8, 1], strides = [1, 1]} : vector<8x2xf32> to vector<8x1xf32>
    %30 = vector.broadcast %29 : vector<8x1xf32> to vector<8x256xf32>
    %31 = arith.mulf %30, %2 : vector<8x256xf32>
    %32 = arith.addf %28, %31 : vector<8x256xf32>
    %33 = vector.extract_strided_slice %24 {offsets = [0, 1], sizes = [8, 1], strides = [1, 1]} : vector<8x2xf32> to vector<8x1xf32>
    %34 = vector.broadcast %33 : vector<8x1xf32> to vector<8x256xf32>
    %35 = arith.mulf %34, %5 : vector<8x256xf32>
    %36 = arith.addf %32, %35 : vector<8x256xf32>
    %37 = math.tanh %36 : vector<8x256xf32>
    %38 = vector.broadcast %26 : vector<8x1xf32> to vector<8x256xf32>
    %39 = arith.mulf %37, %38 : vector<8x256xf32>
    %40 = arith.addf %23, %39 : vector<8x256xf32>
    %c16 = arith.constant 16 : index
    %c0_13 = arith.constant 0 : index
    %41 = vector.load %arg2[%c16, %c0_13] : memref<200x2xf32, #tpu.memory_space<vmem>>, vector<8x2xf32>
    %c16_14 = arith.constant 16 : index
    %c0_15 = arith.constant 0 : index
    %42 = vector.load %arg3[%c16_14, %c0_15] : memref<200x1xf32, #tpu.memory_space<vmem>>, vector<8x1xf32>
    %c16_16 = arith.constant 16 : index
    %c0_17 = arith.constant 0 : index
    %43 = vector.load %arg4[%c16_16, %c0_17] : memref<200x1xf32, #tpu.memory_space<vmem>>, vector<8x1xf32>
    %44 = vector.shape_cast %42 : vector<8x1xf32> to vector<8x1xf32>
    %45 = vector.broadcast %44 : vector<8x1xf32> to vector<8x256xf32>
    %46 = vector.extract_strided_slice %41 {offsets = [0, 0], sizes = [8, 1], strides = [1, 1]} : vector<8x2xf32> to vector<8x1xf32>
    %47 = vector.broadcast %46 : vector<8x1xf32> to vector<8x256xf32>
    %48 = arith.mulf %47, %2 : vector<8x256xf32>
    %49 = arith.addf %45, %48 : vector<8x256xf32>
    %50 = vector.extract_strided_slice %41 {offsets = [0, 1], sizes = [8, 1], strides = [1, 1]} : vector<8x2xf32> to vector<8x1xf32>
    %51 = vector.broadcast %50 : vector<8x1xf32> to vector<8x256xf32>
    %52 = arith.mulf %51, %5 : vector<8x256xf32>
    %53 = arith.addf %49, %52 : vector<8x256xf32>
    %54 = math.tanh %53 : vector<8x256xf32>
    %55 = vector.broadcast %43 : vector<8x1xf32> to vector<8x256xf32>
    %56 = arith.mulf %54, %55 : vector<8x256xf32>
    %57 = arith.addf %40, %56 : vector<8x256xf32>
    %c24 = arith.constant 24 : index
    %c0_18 = arith.constant 0 : index
    %58 = vector.load %arg2[%c24, %c0_18] : memref<200x2xf32, #tpu.memory_space<vmem>>, vector<8x2xf32>
    %c24_19 = arith.constant 24 : index
    %c0_20 = arith.constant 0 : index
    %59 = vector.load %arg3[%c24_19, %c0_20] : memref<200x1xf32, #tpu.memory_space<vmem>>, vector<8x1xf32>
    %c24_21 = arith.constant 24 : index
    %c0_22 = arith.constant 0 : index
    %60 = vector.load %arg4[%c24_21, %c0_22] : memref<200x1xf32, #tpu.memory_space<vmem>>, vector<8x1xf32>
    %61 = vector.shape_cast %59 : vector<8x1xf32> to vector<8x1xf32>
    %62 = vector.broadcast %61 : vector<8x1xf32> to vector<8x256xf32>
    %63 = vector.extract_strided_slice %58 {offsets = [0, 0], sizes = [8, 1], strides = [1, 1]} : vector<8x2xf32> to vector<8x1xf32>
    %64 = vector.broadcast %63 : vector<8x1xf32> to vector<8x256xf32>
    %65 = arith.mulf %64, %2 : vector<8x256xf32>
    %66 = arith.addf %62, %65 : vector<8x256xf32>
    %67 = vector.extract_strided_slice %58 {offsets = [0, 1], sizes = [8, 1], strides = [1, 1]} : vector<8x2xf32> to vector<8x1xf32>
    %68 = vector.broadcast %67 : vector<8x1xf32> to vector<8x256xf32>
    %69 = arith.mulf %68, %5 : vector<8x256xf32>
    %70 = arith.addf %66, %69 : vector<8x256xf32>
    %71 = math.tanh %70 : vector<8x256xf32>
    %72 = vector.broadcast %60 : vector<8x1xf32> to vector<8x256xf32>
    %73 = arith.mulf %71, %72 : vector<8x256xf32>
    %74 = arith.addf %57, %73 : vector<8x256xf32>
    %c32 = arith.constant 32 : index
    %c0_23 = arith.constant 0 : index
    %75 = vector.load %arg2[%c32, %c0_23] : memref<200x2xf32, #tpu.memory_space<vmem>>, vector<8x2xf32>
    %c32_24 = arith.constant 32 : index
    %c0_25 = arith.constant 0 : index
    %76 = vector.load %arg3[%c32_24, %c0_25] : memref<200x1xf32, #tpu.memory_space<vmem>>, vector<8x1xf32>
    %c32_26 = arith.constant 32 : index
    %c0_27 = arith.constant 0 : index
    %77 = vector.load %arg4[%c32_26, %c0_27] : memref<200x1xf32, #tpu.memory_space<vmem>>, vector<8x1xf32>
    %78 = vector.shape_cast %76 : vector<8x1xf32> to vector<8x1xf32>
    %79 = vector.broadcast %78 : vector<8x1xf32> to vector<8x256xf32>
    %80 = vector.extract_strided_slice %75 {offsets = [0, 0], sizes = [8, 1], strides = [1, 1]} : vector<8x2xf32> to vector<8x1xf32>
    %81 = vector.broadcast %80 : vector<8x1xf32> to vector<8x256xf32>
    %82 = arith.mulf %81, %2 : vector<8x256xf32>
    %83 = arith.addf %79, %82 : vector<8x256xf32>
    %84 = vector.extract_strided_slice %75 {offsets = [0, 1], sizes = [8, 1], strides = [1, 1]} : vector<8x2xf32> to vector<8x1xf32>
    %85 = vector.broadcast %84 : vector<8x1xf32> to vector<8x256xf32>
    %86 = arith.mulf %85, %5 : vector<8x256xf32>
    %87 = arith.addf %83, %86 : vector<8x256xf32>
    %88 = math.tanh %87 : vector<8x256xf32>
    %89 = vector.broadcast %77 : vector<8x1xf32> to vector<8x256xf32>
    %90 = arith.mulf %88, %89 : vector<8x256xf32>
    %91 = arith.addf %74, %90 : vector<8x256xf32>
    %c40 = arith.constant 40 : index
    %c0_28 = arith.constant 0 : index
    %92 = vector.load %arg2[%c40, %c0_28] : memref<200x2xf32, #tpu.memory_space<vmem>>, vector<8x2xf32>
    %c40_29 = arith.constant 40 : index
    %c0_30 = arith.constant 0 : index
    %93 = vector.load %arg3[%c40_29, %c0_30] : memref<200x1xf32, #tpu.memory_space<vmem>>, vector<8x1xf32>
    %c40_31 = arith.constant 40 : index
    %c0_32 = arith.constant 0 : index
    %94 = vector.load %arg4[%c40_31, %c0_32] : memref<200x1xf32, #tpu.memory_space<vmem>>, vector<8x1xf32>
    %95 = vector.shape_cast %93 : vector<8x1xf32> to vector<8x1xf32>
    %96 = vector.broadcast %95 : vector<8x1xf32> to vector<8x256xf32>
    %97 = vector.extract_strided_slice %92 {offsets = [0, 0], sizes = [8, 1], strides = [1, 1]} : vector<8x2xf32> to vector<8x1xf32>
    %98 = vector.broadcast %97 : vector<8x1xf32> to vector<8x256xf32>
    %99 = arith.mulf %98, %2 : vector<8x256xf32>
    %100 = arith.addf %96, %99 : vector<8x256xf32>
    %101 = vector.extract_strided_slice %92 {offsets = [0, 1], sizes = [8, 1], strides = [1, 1]} : vector<8x2xf32> to vector<8x1xf32>
    %102 = vector.broadcast %101 : vector<8x1xf32> to vector<8x256xf32>
    %103 = arith.mulf %102, %5 : vector<8x256xf32>
    %104 = arith.addf %100, %103 : vector<8x256xf32>
    %105 = math.tanh %104 : vector<8x256xf32>
    %106 = vector.broadcast %94 : vector<8x1xf32> to vector<8x256xf32>
    %107 = arith.mulf %105, %106 : vector<8x256xf32>
    %108 = arith.addf %91, %107 : vector<8x256xf32>
    %c48 = arith.constant 48 : index
    %c0_33 = arith.constant 0 : index
    %109 = vector.load %arg2[%c48, %c0_33] : memref<200x2xf32, #tpu.memory_space<vmem>>, vector<8x2xf32>
    %c48_34 = arith.constant 48 : index
    %c0_35 = arith.constant 0 : index
    %110 = vector.load %arg3[%c48_34, %c0_35] : memref<200x1xf32, #tpu.memory_space<vmem>>, vector<8x1xf32>
    %c48_36 = arith.constant 48 : index
    %c0_37 = arith.constant 0 : index
    %111 = vector.load %arg4[%c48_36, %c0_37] : memref<200x1xf32, #tpu.memory_space<vmem>>, vector<8x1xf32>
    %112 = vector.shape_cast %110 : vector<8x1xf32> to vector<8x1xf32>
    %113 = vector.broadcast %112 : vector<8x1xf32> to vector<8x256xf32>
    %114 = vector.extract_strided_slice %109 {offsets = [0, 0], sizes = [8, 1], strides = [1, 1]} : vector<8x2xf32> to vector<8x1xf32>
    %115 = vector.broadcast %114 : vector<8x1xf32> to vector<8x256xf32>
    %116 = arith.mulf %115, %2 : vector<8x256xf32>
    %117 = arith.addf %113, %116 : vector<8x256xf32>
    %118 = vector.extract_strided_slice %109 {offsets = [0, 1], sizes = [8, 1], strides = [1, 1]} : vector<8x2xf32> to vector<8x1xf32>
    %119 = vector.broadcast %118 : vector<8x1xf32> to vector<8x256xf32>
    %120 = arith.mulf %119, %5 : vector<8x256xf32>
    %121 = arith.addf %117, %120 : vector<8x256xf32>
    %122 = math.tanh %121 : vector<8x256xf32>
    %123 = vector.broadcast %111 : vector<8x1xf32> to vector<8x256xf32>
    %124 = arith.mulf %122, %123 : vector<8x256xf32>
    %125 = arith.addf %108, %124 : vector<8x256xf32>
    %c56 = arith.constant 56 : index
    %c0_38 = arith.constant 0 : index
    %126 = vector.load %arg2[%c56, %c0_38] : memref<200x2xf32, #tpu.memory_space<vmem>>, vector<8x2xf32>
    %c56_39 = arith.constant 56 : index
    %c0_40 = arith.constant 0 : index
    %127 = vector.load %arg3[%c56_39, %c0_40] : memref<200x1xf32, #tpu.memory_space<vmem>>, vector<8x1xf32>
    %c56_41 = arith.constant 56 : index
    %c0_42 = arith.constant 0 : index
    %128 = vector.load %arg4[%c56_41, %c0_42] : memref<200x1xf32, #tpu.memory_space<vmem>>, vector<8x1xf32>
    %129 = vector.shape_cast %127 : vector<8x1xf32> to vector<8x1xf32>
    %130 = vector.broadcast %129 : vector<8x1xf32> to vector<8x256xf32>
    %131 = vector.extract_strided_slice %126 {offsets = [0, 0], sizes = [8, 1], strides = [1, 1]} : vector<8x2xf32> to vector<8x1xf32>
    %132 = vector.broadcast %131 : vector<8x1xf32> to vector<8x256xf32>
    %133 = arith.mulf %132, %2 : vector<8x256xf32>
    %134 = arith.addf %130, %133 : vector<8x256xf32>
    %135 = vector.extract_strided_slice %126 {offsets = [0, 1], sizes = [8, 1], strides = [1, 1]} : vector<8x2xf32> to vector<8x1xf32>
    %136 = vector.broadcast %135 : vector<8x1xf32> to vector<8x256xf32>
    %137 = arith.mulf %136, %5 : vector<8x256xf32>
    %138 = arith.addf %134, %137 : vector<8x256xf32>
    %139 = math.tanh %138 : vector<8x256xf32>
    %140 = vector.broadcast %128 : vector<8x1xf32> to vector<8x256xf32>
    %141 = arith.mulf %139, %140 : vector<8x256xf32>
    %142 = arith.addf %125, %141 : vector<8x256xf32>
    %c64 = arith.constant 64 : index
    %c0_43 = arith.constant 0 : index
    %143 = vector.load %arg2[%c64, %c0_43] : memref<200x2xf32, #tpu.memory_space<vmem>>, vector<8x2xf32>
    %c64_44 = arith.constant 64 : index
    %c0_45 = arith.constant 0 : index
    %144 = vector.load %arg3[%c64_44, %c0_45] : memref<200x1xf32, #tpu.memory_space<vmem>>, vector<8x1xf32>
    %c64_46 = arith.constant 64 : index
    %c0_47 = arith.constant 0 : index
    %145 = vector.load %arg4[%c64_46, %c0_47] : memref<200x1xf32, #tpu.memory_space<vmem>>, vector<8x1xf32>
    %146 = vector.shape_cast %144 : vector<8x1xf32> to vector<8x1xf32>
    %147 = vector.broadcast %146 : vector<8x1xf32> to vector<8x256xf32>
    %148 = vector.extract_strided_slice %143 {offsets = [0, 0], sizes = [8, 1], strides = [1, 1]} : vector<8x2xf32> to vector<8x1xf32>
    %149 = vector.broadcast %148 : vector<8x1xf32> to vector<8x256xf32>
    %150 = arith.mulf %149, %2 : vector<8x256xf32>
    %151 = arith.addf %147, %150 : vector<8x256xf32>
    %152 = vector.extract_strided_slice %143 {offsets = [0, 1], sizes = [8, 1], strides = [1, 1]} : vector<8x2xf32> to vector<8x1xf32>
    %153 = vector.broadcast %152 : vector<8x1xf32> to vector<8x256xf32>
    %154 = arith.mulf %153, %5 : vector<8x256xf32>
    %155 = arith.addf %151, %154 : vector<8x256xf32>
    %156 = math.tanh %155 : vector<8x256xf32>
    %157 = vector.broadcast %145 : vector<8x1xf32> to vector<8x256xf32>
    %158 = arith.mulf %156, %157 : vector<8x256xf32>
    %159 = arith.addf %142, %158 : vector<8x256xf32>
    %c72 = arith.constant 72 : index
    %c0_48 = arith.constant 0 : index
    %160 = vector.load %arg2[%c72, %c0_48] : memref<200x2xf32, #tpu.memory_space<vmem>>, vector<8x2xf32>
    %c72_49 = arith.constant 72 : index
    %c0_50 = arith.constant 0 : index
    %161 = vector.load %arg3[%c72_49, %c0_50] : memref<200x1xf32, #tpu.memory_space<vmem>>, vector<8x1xf32>
    %c72_51 = arith.constant 72 : index
    %c0_52 = arith.constant 0 : index
    %162 = vector.load %arg4[%c72_51, %c0_52] : memref<200x1xf32, #tpu.memory_space<vmem>>, vector<8x1xf32>
    %163 = vector.shape_cast %161 : vector<8x1xf32> to vector<8x1xf32>
    %164 = vector.broadcast %163 : vector<8x1xf32> to vector<8x256xf32>
    %165 = vector.extract_strided_slice %160 {offsets = [0, 0], sizes = [8, 1], strides = [1, 1]} : vector<8x2xf32> to vector<8x1xf32>
    %166 = vector.broadcast %165 : vector<8x1xf32> to vector<8x256xf32>
    %167 = arith.mulf %166, %2 : vector<8x256xf32>
    %168 = arith.addf %164, %167 : vector<8x256xf32>
    %169 = vector.extract_strided_slice %160 {offsets = [0, 1], sizes = [8, 1], strides = [1, 1]} : vector<8x2xf32> to vector<8x1xf32>
    %170 = vector.broadcast %169 : vector<8x1xf32> to vector<8x256xf32>
    %171 = arith.mulf %170, %5 : vector<8x256xf32>
    %172 = arith.addf %168, %171 : vector<8x256xf32>
    %173 = math.tanh %172 : vector<8x256xf32>
    %174 = vector.broadcast %162 : vector<8x1xf32> to vector<8x256xf32>
    %175 = arith.mulf %173, %174 : vector<8x256xf32>
    %176 = arith.addf %159, %175 : vector<8x256xf32>
    %c80 = arith.constant 80 : index
    %c0_53 = arith.constant 0 : index
    %177 = vector.load %arg2[%c80, %c0_53] : memref<200x2xf32, #tpu.memory_space<vmem>>, vector<8x2xf32>
    %c80_54 = arith.constant 80 : index
    %c0_55 = arith.constant 0 : index
    %178 = vector.load %arg3[%c80_54, %c0_55] : memref<200x1xf32, #tpu.memory_space<vmem>>, vector<8x1xf32>
    %c80_56 = arith.constant 80 : index
    %c0_57 = arith.constant 0 : index
    %179 = vector.load %arg4[%c80_56, %c0_57] : memref<200x1xf32, #tpu.memory_space<vmem>>, vector<8x1xf32>
    %180 = vector.shape_cast %178 : vector<8x1xf32> to vector<8x1xf32>
    %181 = vector.broadcast %180 : vector<8x1xf32> to vector<8x256xf32>
    %182 = vector.extract_strided_slice %177 {offsets = [0, 0], sizes = [8, 1], strides = [1, 1]} : vector<8x2xf32> to vector<8x1xf32>
    %183 = vector.broadcast %182 : vector<8x1xf32> to vector<8x256xf32>
    %184 = arith.mulf %183, %2 : vector<8x256xf32>
    %185 = arith.addf %181, %184 : vector<8x256xf32>
    %186 = vector.extract_strided_slice %177 {offsets = [0, 1], sizes = [8, 1], strides = [1, 1]} : vector<8x2xf32> to vector<8x1xf32>
    %187 = vector.broadcast %186 : vector<8x1xf32> to vector<8x256xf32>
    %188 = arith.mulf %187, %5 : vector<8x256xf32>
    %189 = arith.addf %185, %188 : vector<8x256xf32>
    %190 = math.tanh %189 : vector<8x256xf32>
    %191 = vector.broadcast %179 : vector<8x1xf32> to vector<8x256xf32>
    %192 = arith.mulf %190, %191 : vector<8x256xf32>
    %193 = arith.addf %176, %192 : vector<8x256xf32>
    %c88 = arith.constant 88 : index
    %c0_58 = arith.constant 0 : index
    %194 = vector.load %arg2[%c88, %c0_58] : memref<200x2xf32, #tpu.memory_space<vmem>>, vector<8x2xf32>
    %c88_59 = arith.constant 88 : index
    %c0_60 = arith.constant 0 : index
    %195 = vector.load %arg3[%c88_59, %c0_60] : memref<200x1xf32, #tpu.memory_space<vmem>>, vector<8x1xf32>
    %c88_61 = arith.constant 88 : index
    %c0_62 = arith.constant 0 : index
    %196 = vector.load %arg4[%c88_61, %c0_62] : memref<200x1xf32, #tpu.memory_space<vmem>>, vector<8x1xf32>
    %197 = vector.shape_cast %195 : vector<8x1xf32> to vector<8x1xf32>
    %198 = vector.broadcast %197 : vector<8x1xf32> to vector<8x256xf32>
    %199 = vector.extract_strided_slice %194 {offsets = [0, 0], sizes = [8, 1], strides = [1, 1]} : vector<8x2xf32> to vector<8x1xf32>
    %200 = vector.broadcast %199 : vector<8x1xf32> to vector<8x256xf32>
    %201 = arith.mulf %200, %2 : vector<8x256xf32>
    %202 = arith.addf %198, %201 : vector<8x256xf32>
    %203 = vector.extract_strided_slice %194 {offsets = [0, 1], sizes = [8, 1], strides = [1, 1]} : vector<8x2xf32> to vector<8x1xf32>
    %204 = vector.broadcast %203 : vector<8x1xf32> to vector<8x256xf32>
    %205 = arith.mulf %204, %5 : vector<8x256xf32>
    %206 = arith.addf %202, %205 : vector<8x256xf32>
    %207 = math.tanh %206 : vector<8x256xf32>
    %208 = vector.broadcast %196 : vector<8x1xf32> to vector<8x256xf32>
    %209 = arith.mulf %207, %208 : vector<8x256xf32>
    %210 = arith.addf %193, %209 : vector<8x256xf32>
    %c96 = arith.constant 96 : index
    %c0_63 = arith.constant 0 : index
    %211 = vector.load %arg2[%c96, %c0_63] : memref<200x2xf32, #tpu.memory_space<vmem>>, vector<8x2xf32>
    %c96_64 = arith.constant 96 : index
    %c0_65 = arith.constant 0 : index
    %212 = vector.load %arg3[%c96_64, %c0_65] : memref<200x1xf32, #tpu.memory_space<vmem>>, vector<8x1xf32>
    %c96_66 = arith.constant 96 : index
    %c0_67 = arith.constant 0 : index
    %213 = vector.load %arg4[%c96_66, %c0_67] : memref<200x1xf32, #tpu.memory_space<vmem>>, vector<8x1xf32>
    %214 = vector.shape_cast %212 : vector<8x1xf32> to vector<8x1xf32>
    %215 = vector.broadcast %214 : vector<8x1xf32> to vector<8x256xf32>
    %216 = vector.extract_strided_slice %211 {offsets = [0, 0], sizes = [8, 1], strides = [1, 1]} : vector<8x2xf32> to vector<8x1xf32>
    %217 = vector.broadcast %216 : vector<8x1xf32> to vector<8x256xf32>
    %218 = arith.mulf %217, %2 : vector<8x256xf32>
    %219 = arith.addf %215, %218 : vector<8x256xf32>
    %220 = vector.extract_strided_slice %211 {offsets = [0, 1], sizes = [8, 1], strides = [1, 1]} : vector<8x2xf32> to vector<8x1xf32>
    %221 = vector.broadcast %220 : vector<8x1xf32> to vector<8x256xf32>
    %222 = arith.mulf %221, %5 : vector<8x256xf32>
    %223 = arith.addf %219, %222 : vector<8x256xf32>
    %224 = math.tanh %223 : vector<8x256xf32>
    %225 = vector.broadcast %213 : vector<8x1xf32> to vector<8x256xf32>
    %226 = arith.mulf %224, %225 : vector<8x256xf32>
    %227 = arith.addf %210, %226 : vector<8x256xf32>
    %c104 = arith.constant 104 : index
    %c0_68 = arith.constant 0 : index
    %228 = vector.load %arg2[%c104, %c0_68] : memref<200x2xf32, #tpu.memory_space<vmem>>, vector<8x2xf32>
    %c104_69 = arith.constant 104 : index
    %c0_70 = arith.constant 0 : index
    %229 = vector.load %arg3[%c104_69, %c0_70] : memref<200x1xf32, #tpu.memory_space<vmem>>, vector<8x1xf32>
    %c104_71 = arith.constant 104 : index
    %c0_72 = arith.constant 0 : index
    %230 = vector.load %arg4[%c104_71, %c0_72] : memref<200x1xf32, #tpu.memory_space<vmem>>, vector<8x1xf32>
    %231 = vector.shape_cast %229 : vector<8x1xf32> to vector<8x1xf32>
    %232 = vector.broadcast %231 : vector<8x1xf32> to vector<8x256xf32>
    %233 = vector.extract_strided_slice %228 {offsets = [0, 0], sizes = [8, 1], strides = [1, 1]} : vector<8x2xf32> to vector<8x1xf32>
    %234 = vector.broadcast %233 : vector<8x1xf32> to vector<8x256xf32>
    %235 = arith.mulf %234, %2 : vector<8x256xf32>
    %236 = arith.addf %232, %235 : vector<8x256xf32>
    %237 = vector.extract_strided_slice %228 {offsets = [0, 1], sizes = [8, 1], strides = [1, 1]} : vector<8x2xf32> to vector<8x1xf32>
    %238 = vector.broadcast %237 : vector<8x1xf32> to vector<8x256xf32>
    %239 = arith.mulf %238, %5 : vector<8x256xf32>
    %240 = arith.addf %236, %239 : vector<8x256xf32>
    %241 = math.tanh %240 : vector<8x256xf32>
    %242 = vector.broadcast %230 : vector<8x1xf32> to vector<8x256xf32>
    %243 = arith.mulf %241, %242 : vector<8x256xf32>
    %244 = arith.addf %227, %243 : vector<8x256xf32>
    %c112 = arith.constant 112 : index
    %c0_73 = arith.constant 0 : index
    %245 = vector.load %arg2[%c112, %c0_73] : memref<200x2xf32, #tpu.memory_space<vmem>>, vector<8x2xf32>
    %c112_74 = arith.constant 112 : index
    %c0_75 = arith.constant 0 : index
    %246 = vector.load %arg3[%c112_74, %c0_75] : memref<200x1xf32, #tpu.memory_space<vmem>>, vector<8x1xf32>
    %c112_76 = arith.constant 112 : index
    %c0_77 = arith.constant 0 : index
    %247 = vector.load %arg4[%c112_76, %c0_77] : memref<200x1xf32, #tpu.memory_space<vmem>>, vector<8x1xf32>
    %248 = vector.shape_cast %246 : vector<8x1xf32> to vector<8x1xf32>
    %249 = vector.broadcast %248 : vector<8x1xf32> to vector<8x256xf32>
    %250 = vector.extract_strided_slice %245 {offsets = [0, 0], sizes = [8, 1], strides = [1, 1]} : vector<8x2xf32> to vector<8x1xf32>
    %251 = vector.broadcast %250 : vector<8x1xf32> to vector<8x256xf32>
    %252 = arith.mulf %251, %2 : vector<8x256xf32>
    %253 = arith.addf %249, %252 : vector<8x256xf32>
    %254 = vector.extract_strided_slice %245 {offsets = [0, 1], sizes = [8, 1], strides = [1, 1]} : vector<8x2xf32> to vector<8x1xf32>
    %255 = vector.broadcast %254 : vector<8x1xf32> to vector<8x256xf32>
    %256 = arith.mulf %255, %5 : vector<8x256xf32>
    %257 = arith.addf %253, %256 : vector<8x256xf32>
    %258 = math.tanh %257 : vector<8x256xf32>
    %259 = vector.broadcast %247 : vector<8x1xf32> to vector<8x256xf32>
    %260 = arith.mulf %258, %259 : vector<8x256xf32>
    %261 = arith.addf %244, %260 : vector<8x256xf32>
    %c120 = arith.constant 120 : index
    %c0_78 = arith.constant 0 : index
    %262 = vector.load %arg2[%c120, %c0_78] : memref<200x2xf32, #tpu.memory_space<vmem>>, vector<8x2xf32>
    %c120_79 = arith.constant 120 : index
    %c0_80 = arith.constant 0 : index
    %263 = vector.load %arg3[%c120_79, %c0_80] : memref<200x1xf32, #tpu.memory_space<vmem>>, vector<8x1xf32>
    %c120_81 = arith.constant 120 : index
    %c0_82 = arith.constant 0 : index
    %264 = vector.load %arg4[%c120_81, %c0_82] : memref<200x1xf32, #tpu.memory_space<vmem>>, vector<8x1xf32>
    %265 = vector.shape_cast %263 : vector<8x1xf32> to vector<8x1xf32>
    %266 = vector.broadcast %265 : vector<8x1xf32> to vector<8x256xf32>
    %267 = vector.extract_strided_slice %262 {offsets = [0, 0], sizes = [8, 1], strides = [1, 1]} : vector<8x2xf32> to vector<8x1xf32>
    %268 = vector.broadcast %267 : vector<8x1xf32> to vector<8x256xf32>
    %269 = arith.mulf %268, %2 : vector<8x256xf32>
    %270 = arith.addf %266, %269 : vector<8x256xf32>
    %271 = vector.extract_strided_slice %262 {offsets = [0, 1], sizes = [8, 1], strides = [1, 1]} : vector<8x2xf32> to vector<8x1xf32>
    %272 = vector.broadcast %271 : vector<8x1xf32> to vector<8x256xf32>
    %273 = arith.mulf %272, %5 : vector<8x256xf32>
    %274 = arith.addf %270, %273 : vector<8x256xf32>
    %275 = math.tanh %274 : vector<8x256xf32>
    %276 = vector.broadcast %264 : vector<8x1xf32> to vector<8x256xf32>
    %277 = arith.mulf %275, %276 : vector<8x256xf32>
    %278 = arith.addf %261, %277 : vector<8x256xf32>
    %c128 = arith.constant 128 : index
    %c0_83 = arith.constant 0 : index
    %279 = vector.load %arg2[%c128, %c0_83] : memref<200x2xf32, #tpu.memory_space<vmem>>, vector<8x2xf32>
    %c128_84 = arith.constant 128 : index
    %c0_85 = arith.constant 0 : index
    %280 = vector.load %arg3[%c128_84, %c0_85] : memref<200x1xf32, #tpu.memory_space<vmem>>, vector<8x1xf32>
    %c128_86 = arith.constant 128 : index
    %c0_87 = arith.constant 0 : index
    %281 = vector.load %arg4[%c128_86, %c0_87] : memref<200x1xf32, #tpu.memory_space<vmem>>, vector<8x1xf32>
    %282 = vector.shape_cast %280 : vector<8x1xf32> to vector<8x1xf32>
    %283 = vector.broadcast %282 : vector<8x1xf32> to vector<8x256xf32>
    %284 = vector.extract_strided_slice %279 {offsets = [0, 0], sizes = [8, 1], strides = [1, 1]} : vector<8x2xf32> to vector<8x1xf32>
    %285 = vector.broadcast %284 : vector<8x1xf32> to vector<8x256xf32>
    %286 = arith.mulf %285, %2 : vector<8x256xf32>
    %287 = arith.addf %283, %286 : vector<8x256xf32>
    %288 = vector.extract_strided_slice %279 {offsets = [0, 1], sizes = [8, 1], strides = [1, 1]} : vector<8x2xf32> to vector<8x1xf32>
    %289 = vector.broadcast %288 : vector<8x1xf32> to vector<8x256xf32>
    %290 = arith.mulf %289, %5 : vector<8x256xf32>
    %291 = arith.addf %287, %290 : vector<8x256xf32>
    %292 = math.tanh %291 : vector<8x256xf32>
    %293 = vector.broadcast %281 : vector<8x1xf32> to vector<8x256xf32>
    %294 = arith.mulf %292, %293 : vector<8x256xf32>
    %295 = arith.addf %278, %294 : vector<8x256xf32>
    %c136 = arith.constant 136 : index
    %c0_88 = arith.constant 0 : index
    %296 = vector.load %arg2[%c136, %c0_88] : memref<200x2xf32, #tpu.memory_space<vmem>>, vector<8x2xf32>
    %c136_89 = arith.constant 136 : index
    %c0_90 = arith.constant 0 : index
    %297 = vector.load %arg3[%c136_89, %c0_90] : memref<200x1xf32, #tpu.memory_space<vmem>>, vector<8x1xf32>
    %c136_91 = arith.constant 136 : index
    %c0_92 = arith.constant 0 : index
    %298 = vector.load %arg4[%c136_91, %c0_92] : memref<200x1xf32, #tpu.memory_space<vmem>>, vector<8x1xf32>
    %299 = vector.shape_cast %297 : vector<8x1xf32> to vector<8x1xf32>
    %300 = vector.broadcast %299 : vector<8x1xf32> to vector<8x256xf32>
    %301 = vector.extract_strided_slice %296 {offsets = [0, 0], sizes = [8, 1], strides = [1, 1]} : vector<8x2xf32> to vector<8x1xf32>
    %302 = vector.broadcast %301 : vector<8x1xf32> to vector<8x256xf32>
    %303 = arith.mulf %302, %2 : vector<8x256xf32>
    %304 = arith.addf %300, %303 : vector<8x256xf32>
    %305 = vector.extract_strided_slice %296 {offsets = [0, 1], sizes = [8, 1], strides = [1, 1]} : vector<8x2xf32> to vector<8x1xf32>
    %306 = vector.broadcast %305 : vector<8x1xf32> to vector<8x256xf32>
    %307 = arith.mulf %306, %5 : vector<8x256xf32>
    %308 = arith.addf %304, %307 : vector<8x256xf32>
    %309 = math.tanh %308 : vector<8x256xf32>
    %310 = vector.broadcast %298 : vector<8x1xf32> to vector<8x256xf32>
    %311 = arith.mulf %309, %310 : vector<8x256xf32>
    %312 = arith.addf %295, %311 : vector<8x256xf32>
    %c144 = arith.constant 144 : index
    %c0_93 = arith.constant 0 : index
    %313 = vector.load %arg2[%c144, %c0_93] : memref<200x2xf32, #tpu.memory_space<vmem>>, vector<8x2xf32>
    %c144_94 = arith.constant 144 : index
    %c0_95 = arith.constant 0 : index
    %314 = vector.load %arg3[%c144_94, %c0_95] : memref<200x1xf32, #tpu.memory_space<vmem>>, vector<8x1xf32>
    %c144_96 = arith.constant 144 : index
    %c0_97 = arith.constant 0 : index
    %315 = vector.load %arg4[%c144_96, %c0_97] : memref<200x1xf32, #tpu.memory_space<vmem>>, vector<8x1xf32>
    %316 = vector.shape_cast %314 : vector<8x1xf32> to vector<8x1xf32>
    %317 = vector.broadcast %316 : vector<8x1xf32> to vector<8x256xf32>
    %318 = vector.extract_strided_slice %313 {offsets = [0, 0], sizes = [8, 1], strides = [1, 1]} : vector<8x2xf32> to vector<8x1xf32>
    %319 = vector.broadcast %318 : vector<8x1xf32> to vector<8x256xf32>
    %320 = arith.mulf %319, %2 : vector<8x256xf32>
    %321 = arith.addf %317, %320 : vector<8x256xf32>
    %322 = vector.extract_strided_slice %313 {offsets = [0, 1], sizes = [8, 1], strides = [1, 1]} : vector<8x2xf32> to vector<8x1xf32>
    %323 = vector.broadcast %322 : vector<8x1xf32> to vector<8x256xf32>
    %324 = arith.mulf %323, %5 : vector<8x256xf32>
    %325 = arith.addf %321, %324 : vector<8x256xf32>
    %326 = math.tanh %325 : vector<8x256xf32>
    %327 = vector.broadcast %315 : vector<8x1xf32> to vector<8x256xf32>
    %328 = arith.mulf %326, %327 : vector<8x256xf32>
    %329 = arith.addf %312, %328 : vector<8x256xf32>
    %c152 = arith.constant 152 : index
    %c0_98 = arith.constant 0 : index
    %330 = vector.load %arg2[%c152, %c0_98] : memref<200x2xf32, #tpu.memory_space<vmem>>, vector<8x2xf32>
    %c152_99 = arith.constant 152 : index
    %c0_100 = arith.constant 0 : index
    %331 = vector.load %arg3[%c152_99, %c0_100] : memref<200x1xf32, #tpu.memory_space<vmem>>, vector<8x1xf32>
    %c152_101 = arith.constant 152 : index
    %c0_102 = arith.constant 0 : index
    %332 = vector.load %arg4[%c152_101, %c0_102] : memref<200x1xf32, #tpu.memory_space<vmem>>, vector<8x1xf32>
    %333 = vector.shape_cast %331 : vector<8x1xf32> to vector<8x1xf32>
    %334 = vector.broadcast %333 : vector<8x1xf32> to vector<8x256xf32>
    %335 = vector.extract_strided_slice %330 {offsets = [0, 0], sizes = [8, 1], strides = [1, 1]} : vector<8x2xf32> to vector<8x1xf32>
    %336 = vector.broadcast %335 : vector<8x1xf32> to vector<8x256xf32>
    %337 = arith.mulf %336, %2 : vector<8x256xf32>
    %338 = arith.addf %334, %337 : vector<8x256xf32>
    %339 = vector.extract_strided_slice %330 {offsets = [0, 1], sizes = [8, 1], strides = [1, 1]} : vector<8x2xf32> to vector<8x1xf32>
    %340 = vector.broadcast %339 : vector<8x1xf32> to vector<8x256xf32>
    %341 = arith.mulf %340, %5 : vector<8x256xf32>
    %342 = arith.addf %338, %341 : vector<8x256xf32>
    %343 = math.tanh %342 : vector<8x256xf32>
    %344 = vector.broadcast %332 : vector<8x1xf32> to vector<8x256xf32>
    %345 = arith.mulf %343, %344 : vector<8x256xf32>
    %346 = arith.addf %329, %345 : vector<8x256xf32>
    %c160 = arith.constant 160 : index
    %c0_103 = arith.constant 0 : index
    %347 = vector.load %arg2[%c160, %c0_103] : memref<200x2xf32, #tpu.memory_space<vmem>>, vector<8x2xf32>
    %c160_104 = arith.constant 160 : index
    %c0_105 = arith.constant 0 : index
    %348 = vector.load %arg3[%c160_104, %c0_105] : memref<200x1xf32, #tpu.memory_space<vmem>>, vector<8x1xf32>
    %c160_106 = arith.constant 160 : index
    %c0_107 = arith.constant 0 : index
    %349 = vector.load %arg4[%c160_106, %c0_107] : memref<200x1xf32, #tpu.memory_space<vmem>>, vector<8x1xf32>
    %350 = vector.shape_cast %348 : vector<8x1xf32> to vector<8x1xf32>
    %351 = vector.broadcast %350 : vector<8x1xf32> to vector<8x256xf32>
    %352 = vector.extract_strided_slice %347 {offsets = [0, 0], sizes = [8, 1], strides = [1, 1]} : vector<8x2xf32> to vector<8x1xf32>
    %353 = vector.broadcast %352 : vector<8x1xf32> to vector<8x256xf32>
    %354 = arith.mulf %353, %2 : vector<8x256xf32>
    %355 = arith.addf %351, %354 : vector<8x256xf32>
    %356 = vector.extract_strided_slice %347 {offsets = [0, 1], sizes = [8, 1], strides = [1, 1]} : vector<8x2xf32> to vector<8x1xf32>
    %357 = vector.broadcast %356 : vector<8x1xf32> to vector<8x256xf32>
    %358 = arith.mulf %357, %5 : vector<8x256xf32>
    %359 = arith.addf %355, %358 : vector<8x256xf32>
    %360 = math.tanh %359 : vector<8x256xf32>
    %361 = vector.broadcast %349 : vector<8x1xf32> to vector<8x256xf32>
    %362 = arith.mulf %360, %361 : vector<8x256xf32>
    %363 = arith.addf %346, %362 : vector<8x256xf32>
    %c168 = arith.constant 168 : index
    %c0_108 = arith.constant 0 : index
    %364 = vector.load %arg2[%c168, %c0_108] : memref<200x2xf32, #tpu.memory_space<vmem>>, vector<8x2xf32>
    %c168_109 = arith.constant 168 : index
    %c0_110 = arith.constant 0 : index
    %365 = vector.load %arg3[%c168_109, %c0_110] : memref<200x1xf32, #tpu.memory_space<vmem>>, vector<8x1xf32>
    %c168_111 = arith.constant 168 : index
    %c0_112 = arith.constant 0 : index
    %366 = vector.load %arg4[%c168_111, %c0_112] : memref<200x1xf32, #tpu.memory_space<vmem>>, vector<8x1xf32>
    %367 = vector.shape_cast %365 : vector<8x1xf32> to vector<8x1xf32>
    %368 = vector.broadcast %367 : vector<8x1xf32> to vector<8x256xf32>
    %369 = vector.extract_strided_slice %364 {offsets = [0, 0], sizes = [8, 1], strides = [1, 1]} : vector<8x2xf32> to vector<8x1xf32>
    %370 = vector.broadcast %369 : vector<8x1xf32> to vector<8x256xf32>
    %371 = arith.mulf %370, %2 : vector<8x256xf32>
    %372 = arith.addf %368, %371 : vector<8x256xf32>
    %373 = vector.extract_strided_slice %364 {offsets = [0, 1], sizes = [8, 1], strides = [1, 1]} : vector<8x2xf32> to vector<8x1xf32>
    %374 = vector.broadcast %373 : vector<8x1xf32> to vector<8x256xf32>
    %375 = arith.mulf %374, %5 : vector<8x256xf32>
    %376 = arith.addf %372, %375 : vector<8x256xf32>
    %377 = math.tanh %376 : vector<8x256xf32>
    %378 = vector.broadcast %366 : vector<8x1xf32> to vector<8x256xf32>
    %379 = arith.mulf %377, %378 : vector<8x256xf32>
    %380 = arith.addf %363, %379 : vector<8x256xf32>
    %c176 = arith.constant 176 : index
    %c0_113 = arith.constant 0 : index
    %381 = vector.load %arg2[%c176, %c0_113] : memref<200x2xf32, #tpu.memory_space<vmem>>, vector<8x2xf32>
    %c176_114 = arith.constant 176 : index
    %c0_115 = arith.constant 0 : index
    %382 = vector.load %arg3[%c176_114, %c0_115] : memref<200x1xf32, #tpu.memory_space<vmem>>, vector<8x1xf32>
    %c176_116 = arith.constant 176 : index
    %c0_117 = arith.constant 0 : index
    %383 = vector.load %arg4[%c176_116, %c0_117] : memref<200x1xf32, #tpu.memory_space<vmem>>, vector<8x1xf32>
    %384 = vector.shape_cast %382 : vector<8x1xf32> to vector<8x1xf32>
    %385 = vector.broadcast %384 : vector<8x1xf32> to vector<8x256xf32>
    %386 = vector.extract_strided_slice %381 {offsets = [0, 0], sizes = [8, 1], strides = [1, 1]} : vector<8x2xf32> to vector<8x1xf32>
    %387 = vector.broadcast %386 : vector<8x1xf32> to vector<8x256xf32>
    %388 = arith.mulf %387, %2 : vector<8x256xf32>
    %389 = arith.addf %385, %388 : vector<8x256xf32>
    %390 = vector.extract_strided_slice %381 {offsets = [0, 1], sizes = [8, 1], strides = [1, 1]} : vector<8x2xf32> to vector<8x1xf32>
    %391 = vector.broadcast %390 : vector<8x1xf32> to vector<8x256xf32>
    %392 = arith.mulf %391, %5 : vector<8x256xf32>
    %393 = arith.addf %389, %392 : vector<8x256xf32>
    %394 = math.tanh %393 : vector<8x256xf32>
    %395 = vector.broadcast %383 : vector<8x1xf32> to vector<8x256xf32>
    %396 = arith.mulf %394, %395 : vector<8x256xf32>
    %397 = arith.addf %380, %396 : vector<8x256xf32>
    %c184 = arith.constant 184 : index
    %c0_118 = arith.constant 0 : index
    %398 = vector.load %arg2[%c184, %c0_118] : memref<200x2xf32, #tpu.memory_space<vmem>>, vector<8x2xf32>
    %c184_119 = arith.constant 184 : index
    %c0_120 = arith.constant 0 : index
    %399 = vector.load %arg3[%c184_119, %c0_120] : memref<200x1xf32, #tpu.memory_space<vmem>>, vector<8x1xf32>
    %c184_121 = arith.constant 184 : index
    %c0_122 = arith.constant 0 : index
    %400 = vector.load %arg4[%c184_121, %c0_122] : memref<200x1xf32, #tpu.memory_space<vmem>>, vector<8x1xf32>
    %401 = vector.shape_cast %399 : vector<8x1xf32> to vector<8x1xf32>
    %402 = vector.broadcast %401 : vector<8x1xf32> to vector<8x256xf32>
    %403 = vector.extract_strided_slice %398 {offsets = [0, 0], sizes = [8, 1], strides = [1, 1]} : vector<8x2xf32> to vector<8x1xf32>
    %404 = vector.broadcast %403 : vector<8x1xf32> to vector<8x256xf32>
    %405 = arith.mulf %404, %2 : vector<8x256xf32>
    %406 = arith.addf %402, %405 : vector<8x256xf32>
    %407 = vector.extract_strided_slice %398 {offsets = [0, 1], sizes = [8, 1], strides = [1, 1]} : vector<8x2xf32> to vector<8x1xf32>
    %408 = vector.broadcast %407 : vector<8x1xf32> to vector<8x256xf32>
    %409 = arith.mulf %408, %5 : vector<8x256xf32>
    %410 = arith.addf %406, %409 : vector<8x256xf32>
    %411 = math.tanh %410 : vector<8x256xf32>
    %412 = vector.broadcast %400 : vector<8x1xf32> to vector<8x256xf32>
    %413 = arith.mulf %411, %412 : vector<8x256xf32>
    %414 = arith.addf %397, %413 : vector<8x256xf32>
    %c192 = arith.constant 192 : index
    %c0_123 = arith.constant 0 : index
    %415 = vector.load %arg2[%c192, %c0_123] : memref<200x2xf32, #tpu.memory_space<vmem>>, vector<8x2xf32>
    %c192_124 = arith.constant 192 : index
    %c0_125 = arith.constant 0 : index
    %416 = vector.load %arg3[%c192_124, %c0_125] : memref<200x1xf32, #tpu.memory_space<vmem>>, vector<8x1xf32>
    %c192_126 = arith.constant 192 : index
    %c0_127 = arith.constant 0 : index
    %417 = vector.load %arg4[%c192_126, %c0_127] : memref<200x1xf32, #tpu.memory_space<vmem>>, vector<8x1xf32>
    %418 = vector.shape_cast %416 : vector<8x1xf32> to vector<8x1xf32>
    %419 = vector.broadcast %418 : vector<8x1xf32> to vector<8x256xf32>
    %420 = vector.extract_strided_slice %415 {offsets = [0, 0], sizes = [8, 1], strides = [1, 1]} : vector<8x2xf32> to vector<8x1xf32>
    %421 = vector.broadcast %420 : vector<8x1xf32> to vector<8x256xf32>
    %422 = arith.mulf %421, %2 : vector<8x256xf32>
    %423 = arith.addf %419, %422 : vector<8x256xf32>
    %424 = vector.extract_strided_slice %415 {offsets = [0, 1], sizes = [8, 1], strides = [1, 1]} : vector<8x2xf32> to vector<8x1xf32>
    %425 = vector.broadcast %424 : vector<8x1xf32> to vector<8x256xf32>
    %426 = arith.mulf %425, %5 : vector<8x256xf32>
    %427 = arith.addf %423, %426 : vector<8x256xf32>
    %428 = math.tanh %427 : vector<8x256xf32>
    %429 = vector.broadcast %417 : vector<8x1xf32> to vector<8x256xf32>
    %430 = arith.mulf %428, %429 : vector<8x256xf32>
    %431 = arith.addf %414, %430 : vector<8x256xf32>
    %cst_128 = arith.constant dense<0.000000e+00> : vector<256xf32>
    %432 = vector.multi_reduction <add>, %431, %cst_128 [0] : vector<8x256xf32> to vector<256xf32>
    %433 = vector.shape_cast %432 : vector<256xf32> to vector<1x256xf32>
    %c0_129 = arith.constant 0 : index
    %c0_130 = arith.constant 0 : index
    %434 = vector.load %arg5[%c0_129, %c0_130] : memref<1x1xf32, #tpu.memory_space<vmem>>, vector<1x1xf32>
    %435 = vector.broadcast %434 : vector<1x1xf32> to vector<1x256xf32>
    %436 = arith.addf %433, %435 : vector<1x256xf32>
    %c0_131 = arith.constant 0 : index
    %c0_132 = arith.constant 0 : index
    %437 = vector.load %arg6[%c0_131, %c0_132] : memref<1x256xf32, #tpu.memory_space<vmem>>, vector<1x256xf32>
    tpu.vector_store %arg6[%c0_131, %c0_132], %436 {strides = array<i32>} : memref<1x256xf32, #tpu.memory_space<vmem>>, vector<1x256xf32>,
    return
  }
  func.func @transform_0(%arg0: i32) -> (i32, i32) {
    %c0_i32 = arith.constant 0 : i32
    %c0_i32_0 = arith.constant 0 : i32
    return %c0_i32, %arg0 : i32, i32
  }
  func.func @transform_1(%arg0: i32) -> (i32, i32) {
    %c0_i32 = arith.constant 0 : i32
    %c0_i32_0 = arith.constant 0 : i32
    %c0_i32_1 = arith.constant 0 : i32
    return %c0_i32, %c0_i32_0 : i32, i32
  }
  func.func @transform_2(%arg0: i32) -> (i32, i32) {
    %c0_i32 = arith.constant 0 : i32
    %c0_i32_0 = arith.constant 0 : i32
    %c0_i32_1 = arith.constant 0 : i32
    return %c0_i32, %c0_i32_0 : i32, i32
  }
  func.func @transform_3(%arg0: i32) -> (i32, i32) {
    %c0_i32 = arith.constant 0 : i32
    %c0_i32_0 = arith.constant 0 : i32
    %c0_i32_1 = arith.constant 0 : i32
    return %c0_i32, %c0_i32_0 : i32, i32
  }
  func.func @transform_4(%arg0: i32) -> (i32, i32) {
    %c0_i32 = arith.constant 0 : i32
    %c0_i32_0 = arith.constant 0 : i32
    %c0_i32_1 = arith.constant 0 : i32
    return %c0_i32, %c0_i32_0 : i32, i32
  }
  func.func @transform_5(%arg0: i32) -> (i32, i32) {
    %c0_i32 = arith.constant 0 : i32
    %c0_i32_0 = arith.constant 0 : i32
    return %c0_i32, %arg0 : i32, i32
  }
}

</mosaic_0001>

<llo_original>
// kernel: decoder_forward.1
$region0: #{decoder_forward.1}
  #allocation0 [shape = 'u32[]', space=smem, size = 0x4, offset = 0x4, fixed_abs, tag = 'smem constant byte address 0x4 - core index']
  #allocation1 [shape = 'u32[144,128]{1,0:T(1,128)}', space=vmem, size = 0x12000, scoped, tag = 'internal scratch']
  #allocation2 [shape = 'f32[1,1]{1,0:T(1,128)S(1)}', space=vmem, size = 0x200, scoped, tag = 'scoped memory for decoder_forward.1']
  %s0 = inlined_call_operand.vmem [shape: f32[2,300], index: 0, kind: input, shape index: {}]
  %s1 = inlined_call_operand.vmem [shape: f32[200,2], index: 1, kind: input, shape index: {}]
  %s2 = inlined_call_operand.vmem [shape: f32[200,1], index: 2, kind: input, shape index: {}]
  %s3 = inlined_call_operand.vmem [shape: f32[200,1], index: 3, kind: input, shape index: {}]
  %s4 = inlined_call_operand.<no memory space> [shape: f32[1,1], index: 4, kind: input, shape index: {}]
  %s5 = inlined_call_operand.vmem [shape: f32[1,300], index: 5, kind: output, shape index: {}]
  %s6 = sld [smem:[#allocation0]]
  $region115: #{decoder_forward.1} parent=0
    _
  %s8 = ssub.s32 1, %s6
  %s9 = scalar_select 0, %s8, %s6
  %v10 = vstv %s4
  %11 = vst [vmem:[#allocation2] sm:$0x1] %v10
  $region1: #{decoder_forward.1} parent=0
    #allocation3 [shape = 'u8[2048]{0}', space=vmem, size = 0x800, scoped, tag = 'output window, operand 0']
    loop: start=0, step=1, limit=4
    $region2: #{decoder_forward.1} parent=1 // loop_pre_header
      _
    $region3: #{decoder_forward.1} parent=1 // loop_header
      %s13 = sphi 0, %s17
      %p14 = scmp.ge.s32.totalorder %s13, 4
      %s23 = sphi 0, %s25
      %s26 = sphi 0, %s23
      %s27 = sphi 0, %s26
      %s43 = sphi 0, %s27
      %s47 = sphi 0, %s47
      %s49 = sphi 0, %s47
      %s50 = sphi 0, %s49
      %s64 = sphi 0, %s50
      %s68 = sphi 0, %s68
      %s70 = sphi 0, %s68
      %s71 = sphi 0, %s70
      %s85 = sphi 0, %s71
      %s89 = sphi 0, %s89
      %s91 = sphi 0, %s89
      %s92 = sphi 0, %s91
      %s106 = sphi 0, %s92
      %s110 = sphi 0, %s110
      %s112 = sphi 0, %s110
      %s113 = sphi 0, %s112
      %s127 = sphi 0, %s113
      %s133 = sphi 0, %s135
      %s136 = sphi 0, %s133
      %s137 = sphi 0, %s136
      %s153 = sphi 0, %s137
    $region4: #{decoder_forward.1} parent=1 // loop_header_branch
      %16 = sbr.rel (%p14) target = $region8
    $region5: #{decoder_forward.1} parent=1 // loop_body
      %s18 = ssub.s32 %s13, 1
      %s19 = ssub.s32 %s13, 2
      %s20 = sadd.s32 %s13, 1
      %s21 = ssub.s32 %s13, %s20
      %p22 = scmp.eq.s32.totalorder %s21, 0
      %s24 = sadd.s32 %s23, 1
      %s25 = scalar_select %p22, %s23, %s24
      %p28 = pneg %p22
      %p29 = scmp.eq.s32.totalorder %s13, 1
      %p30 = por %p28, %p29
      %p31 = scmp.ne.s32.totalorder %s23, %s26
      %p32 = scmp.eq.s32.totalorder %s13, 0
      %p33 = por %p31, %p32
      %p34 = scmp.ne.s32.totalorder %s23, %s26
      %p35 = scmp.eq.s32.totalorder %s18, 1
      %p36 = por %p34, %p35
      %p37 = scmp.ne.s32.totalorder %s26, %s27
      %p38 = scmp.eq.s32.totalorder %s18, 0
      %p39 = por %p37, %p38
      %p40 = scmp.ne.s32.totalorder %s26, %s27
      %p41 = scmp.eq.s32.totalorder %s19, 1
      %p42 = por %p40, %p41
      %p44 = scmp.ne.s32.totalorder %s27, %s43
      %p45 = scmp.eq.s32.totalorder %s19, 0
      %p46 = por %p44, %p45
      %s48 = sadd.s32 %s47, 1
      %p51 = scmp.eq.s32.totalorder %s13, 1
      %p52 = scmp.ne.s32.totalorder %s47, %s49
      %p53 = scmp.eq.s32.totalorder %s13, 0
      %p54 = por %p52, %p53
      %p55 = scmp.ne.s32.totalorder %s47, %s49
      %p56 = scmp.eq.s32.totalorder %s18, 1
      %p57 = por %p55, %p56
      %p58 = scmp.ne.s32.totalorder %s49, %s50
      %p59 = scmp.eq.s32.totalorder %s18, 0
      %p60 = por %p58, %p59
      %p61 = scmp.ne.s32.totalorder %s49, %s50
      %p62 = scmp.eq.s32.totalorder %s19, 1
      %p63 = por %p61, %p62
      %p65 = scmp.ne.s32.totalorder %s50, %s64
      %p66 = scmp.eq.s32.totalorder %s19, 0
      %p67 = por %p65, %p66
      %s69 = sadd.s32 %s68, 1
      %p72 = scmp.eq.s32.totalorder %s13, 1
      %p73 = scmp.ne.s32.totalorder %s68, %s70
      %p74 = scmp.eq.s32.totalorder %s13, 0
      %p75 = por %p73, %p74
      %p76 = scmp.ne.s32.totalorder %s68, %s70
      %p77 = scmp.eq.s32.totalorder %s18, 1
      %p78 = por %p76, %p77
      %p79 = scmp.ne.s32.totalorder %s70, %s71
      %p80 = scmp.eq.s32.totalorder %s18, 0
      %p81 = por %p79, %p80
      %p82 = scmp.ne.s32.totalorder %s70, %s71
      %p83 = scmp.eq.s32.totalorder %s19, 1
      %p84 = por %p82, %p83
      %p86 = scmp.ne.s32.totalorder %s71, %s85
      %p87 = scmp.eq.s32.totalorder %s19, 0
      %p88 = por %p86, %p87
      %s90 = sadd.s32 %s89, 1
      %p93 = scmp.eq.s32.totalorder %s13, 1
      %p94 = scmp.ne.s32.totalorder %s89, %s91
      %p95 = scmp.eq.s32.totalorder %s13, 0
      %p96 = por %p94, %p95
      %p97 = scmp.ne.s32.totalorder %s89, %s91
      %p98 = scmp.eq.s32.totalorder %s18, 1
      %p99 = por %p97, %p98
      %p100 = scmp.ne.s32.totalorder %s91, %s92
      %p101 = scmp.eq.s32.totalorder %s18, 0
      %p102 = por %p100, %p101
      %p103 = scmp.ne.s32.totalorder %s91, %s92
      %p104 = scmp.eq.s32.totalorder %s19, 1
      %p105 = por %p103, %p104
      %p107 = scmp.ne.s32.totalorder %s92, %s106
      %p108 = scmp.eq.s32.totalorder %s19, 0
      %p109 = por %p107, %p108
      %s111 = sadd.s32 %s110, 1
      %p114 = scmp.eq.s32.totalorder %s13, 1
      %p115 = scmp.ne.s32.totalorder %s110, %s112
      %p116 = scmp.eq.s32.totalorder %s13, 0
      %p117 = por %p115, %p116
      %p118 = scmp.ne.s32.totalorder %s110, %s112
      %p119 = scmp.eq.s32.totalorder %s18, 1
      %p120 = por %p118, %p119
      %p121 = scmp.ne.s32.totalorder %s112, %s113
      %p122 = scmp.eq.s32.totalorder %s18, 0
      %p123 = por %p121, %p122
      %p124 = scmp.ne.s32.totalorder %s112, %s113
      %p125 = scmp.eq.s32.totalorder %s19, 1
      %p126 = por %p124, %p125
      %p128 = scmp.ne.s32.totalorder %s113, %s127
      %p129 = scmp.eq.s32.totalorder %s19, 0
      %p130 = por %p128, %p129
      %s131 = ssub.s32 %s13, %s20
      %p132 = scmp.eq.s32.totalorder %s131, 0
      %s134 = sadd.s32 %s133, 1
      %s135 = scalar_select %p132, %s133, %s134
      %p138 = pneg %p132
      %p139 = scmp.eq.s32.totalorder %s13, 1
      %p140 = por %p138, %p139
      %p141 = scmp.ne.s32.totalorder %s133, %s136
      %p142 = scmp.eq.s32.totalorder %s13, 0
      %p143 = por %p141, %p142
      %p144 = scmp.ne.s32.totalorder %s133, %s136
      %p145 = scmp.eq.s32.totalorder %s18, 1
      %p146 = por %p144, %p145
      %p147 = scmp.ne.s32.totalorder %s136, %s137
      %p148 = scmp.eq.s32.totalorder %s18, 0
      %p149 = por %p147, %p148
      %p150 = scmp.ne.s32.totalorder %s136, %s137
      %p151 = scmp.eq.s32.totalorder %s19, 1
      %p152 = por %p150, %p151
      %p154 = scmp.ne.s32.totalorder %s137, %s153
      %p155 = scmp.eq.s32.totalorder %s19, 0
      %p156 = por %p154, %p155
      %p157 = scmp.le.s32.totalorder 1, %s13
      %p158 = scmp.lt.s32.totalorder %s13, 3
      %p159 = pnand %p157, %p158
      %p160 = pneg %p159
      // Predicated region
      $region9: #{decoder_forward.1} parent=5 // pred_check
        _
      $region10: #{decoder_forward.1} parent=5 // pred_check_branch
        %162 = sbr.rel (%p159) target = $region12
      $region11: #{decoder_forward.1} parent=5 // pred_region
        %s163 = ssub.s32 %s13, 1
        // Predicated region
        $region13: #{decoder_forward.1} parent=11 // pred_check
          %p164 = pneg %p60
        $region14: #{decoder_forward.1} parent=11 // pred_check_branch
          %166 = sbr.rel (%p164) target = $region16
        $region15: #{decoder_forward.1} parent=11 // pred_region
          _
        $region16: #{decoder_forward.1} parent=11 // pred_fallthru
          _
        // Predicated region
        $region17: #{decoder_forward.1} parent=11 // pred_check
          %p167 = pneg %p81
        $region18: #{decoder_forward.1} parent=11 // pred_check_branch
          %169 = sbr.rel (%p167) target = $region20
        $region19: #{decoder_forward.1} parent=11 // pred_region
          _
        $region20: #{decoder_forward.1} parent=11 // pred_fallthru
          _
        // Predicated region
        $region21: #{decoder_forward.1} parent=11 // pred_check
          %p170 = pneg %p102
        $region22: #{decoder_forward.1} parent=11 // pred_check_branch
          %172 = sbr.rel (%p170) target = $region24
        $region23: #{decoder_forward.1} parent=11 // pred_region
          _
        $region24: #{decoder_forward.1} parent=11 // pred_fallthru
          _
        // Predicated region
        $region25: #{decoder_forward.1} parent=11 // pred_check
          %p173 = pneg %p123
        $region26: #{decoder_forward.1} parent=11 // pred_check_branch
          %175 = sbr.rel (%p173) target = $region28
        $region27: #{decoder_forward.1} parent=11 // pred_region
          _
        $region28: #{decoder_forward.1} parent=11 // pred_fallthru
          _
      $region12: #{decoder_forward.1} parent=5 // pred_fallthru
        _
      %p176 = scmp.lt.s32.totalorder %s13, 2
      // Predicated region
      $region29: #{decoder_forward.1} parent=5 // pred_check
        %p177 = pneg %p176
      $region30: #{decoder_forward.1} parent=5 // pred_check_branch
        %179 = sbr.rel (%p177) target = $region32
      $region31: #{decoder_forward.1} parent=5 // pred_region
        // Predicated region
        $region33: #{decoder_forward.1} parent=31 // pred_check
          %p180 = pneg %p33
        $region34: #{decoder_forward.1} parent=31 // pred_check_branch
          %182 = sbr.rel (%p180) target = $region36
        $region35: #{decoder_forward.1} parent=31 // pred_region
          %s183 = smul.u32 2, %s13
          %s184 = ssub.s32 3, %s183
          %p185 = scmp.lt.s32.totalorder %s184, 2
          %s186 = scalar_select %p185, %s184, 2
          %s187 = smul.u32 32, %s186
          %p188 = scmp.lt.s32.totalorder %s183, 2
          %s189 = scalar_select %p188, %s183, 2
          %s190 = smul.addr %s189, 2
          %s191 = scalar_lea.vmem %s0, %s190
          %s192 = smul.u32 2, %s13
          %s193 = ssub.s32 3, %s192
          %p194 = scmp.lt.s32.totalorder %s193, 2
          %s195 = scalar_select %p194, %s193, 2
          %s196 = smul.u32 32, %s195
        $region36: #{decoder_forward.1} parent=31 // pred_fallthru
          _
      $region32: #{decoder_forward.1} parent=5 // pred_fallthru
        _
      %p197 = scmp.le.s32.totalorder 1, %s13
      %p198 = scmp.lt.s32.totalorder %s13, 3
      %p199 = pnand %p197, %p198
      %p200 = pneg %p199
      // Predicated region
      $region37: #{decoder_forward.1} parent=5 // pred_check
        _
      $region38: #{decoder_forward.1} parent=5 // pred_check_branch
        %202 = sbr.rel (%p199) target = $region40
      $region39: #{decoder_forward.1} parent=5 // pred_region
        %s203 = ssub.s32 %s13, 1
        %s204 = smul.u32 2, %s18
        %s205 = ssub.s32 3, %s204
        %p206 = scmp.lt.s32.totalorder %s205, 2
        %s207 = scalar_select %p206, %s205, 2
        %s208 = smul.u32 32, %s207
        %p209 = scmp.lt.s32.totalorder %s204, 2
        %s210 = scalar_select %p209, %s204, 2
        %s211 = smul.addr %s210, 2
        %s212 = scalar_lea.vmem %s0, %s211
        %p213 = pneg %p39
        %p214 = pneg %p36
        %p215 = pneg %p60
        %p216 = pneg %p57
        %p217 = pneg %p81
        %p218 = pneg %p78
        %p219 = pneg %p102
        %p220 = pneg %p99
        %p221 = pneg %p123
        %p222 = pneg %p120
        %p223 = pneg %p149
        %p224 = pneg %p146
        %s225 = sand.u32 %s136, 1
        %s226 = sand.u32 %s136, 1
        %s227 = smul.addr %s226, 2
        %s228 = scalar_lea.vmem [#allocation3], %s227
        %s229 = smul.u32 2, %s18
        %s230 = ssub.s32 3, %s229
        %p231 = scmp.lt.s32.totalorder %s230, 2
        %s232 = scalar_select %p231, %s230, 2
        %s233 = smul.u32 32, %s232
        %p234 = scmp.lt.s32.totalorder %s229, 2
        %s235 = scalar_select %p234, %s229, 2
        %s236 = smul.addr %s235, 2
        %s237 = scalar_lea.vmem %s0, %s236
        %s238 = smul.u32 2, %s18
        %s239 = ssub.s32 3, %s238
        %p240 = scmp.lt.s32.totalorder %s239, 2
        %s241 = scalar_select %p240, %s239, 2
        %s242 = smul.u32 32, %s241
        %s243 = smul.u32 2, %s18
        %s244 = ssub.s32 3, %s243
        %p245 = scmp.lt.s32.totalorder %s244, 2
        %s246 = scalar_select %p245, %s244, 2
        %s247 = smul.u32 16, %s246
        %v248 = vld [vmem:[%s237] ss:$2 sm:$0x3]
        %v250 = vlaneseq
        %v251 = vshrl.u32 %v250, 7
        %v252 = vsub.s32 0, %v251
        %v253 = vrot.slane %v248, %v252
        %v254 = vlaneseq
        %v255 = vshrl.u32 %v254, 7
        %v256 = vsub.s32 1, %v255
        %v257 = vrot.slane %v248, %v256
        %s260 = scalar_lea.vmem %s237, 1
        %v261 = vld [vmem:[%s260] ss:$2 sm:$0x3]
        %v263 = vlaneseq
        %v264 = vshrl.u32 %v263, 7
        %v265 = vsub.s32 0, %v264
        %v266 = vrot.slane %v261, %v265
        %v267 = vlaneseq
        %v268 = vshrl.u32 %v267, 7
        %v269 = vsub.s32 1, %v268
        %v270 = vrot.slane %v261, %v269
        %v273 = vld [vmem:[%s1] sm:$0xff]
        %v274 = vld [vmem:[%s2] sm:$0xff]
        %v275 = vld [vmem:[%s3] sm:$0xff]
        %277 = vset.pattern.permute.xlu0 0
        %278 = vperm.xlu0 %277, %v274
        %v279 = vpop.permute.xlu0 %278
        %282 = vset.pattern.permute.xlu0 0
        %283 = vperm.xlu0 %282, %v273
        %v284 = vpop.permute.xlu0 %283
        %v286 = vmul.f32 %v284, %v253
        %v287 = vmul.f32 %v284, %v257
        %v288 = vadd.f32 %v279, %v286
        %v289 = vadd.f32 %v279, %v287
        %290 = vset.pattern.permute.xlu0 1
        %291 = vperm.xlu0 %290, %v273
        %v292 = vpop.permute.xlu0 %291
        %v294 = vmul.f32 %v292, %v266
        %v295 = vmul.f32 %v292, %v270
        %v296 = vadd.f32 %v288, %v294
        %v297 = vadd.f32 %v289, %v295
        %v298 = vtanh.pop %v296
        %v299 = vtanh.pop %v297
        %301 = vset.pattern.permute.xlu0 0
        %302 = vperm.xlu0 %301, %v275
        %v303 = vpop.permute.xlu0 %302
        %v305 = vmul.f32 %v298, %v303
        %v306 = vmul.f32 %v299, %v303
        %v307 = vadd.f32 %v305, 0.0
        %v308 = vadd.f32 %v306, 0.0
        %v309 = vld [vmem:[%s1 + $0x8] sm:$0xff]
        %v310 = vld [vmem:[%s2 + $0x8] sm:$0xff]
        %v311 = vld [vmem:[%s3 + $0x8] sm:$0xff]
        %313 = vset.pattern.permute.xlu0 0
        %314 = vperm.xlu0 %313, %v310
        %v315 = vpop.permute.xlu0 %314
        %318 = vset.pattern.permute.xlu0 0
        %319 = vperm.xlu0 %318, %v309
        %v320 = vpop.permute.xlu0 %319
        %v322 = vmul.f32 %v320, %v253
        %v323 = vmul.f32 %v320, %v257
        %v324 = vadd.f32 %v315, %v322
        %v325 = vadd.f32 %v315, %v323
        %326 = vset.pattern.permute.xlu0 1
        %327 = vperm.xlu0 %326, %v309
        %v328 = vpop.permute.xlu0 %327
        %v330 = vmul.f32 %v328, %v266
        %v331 = vmul.f32 %v328, %v270
        %v332 = vadd.f32 %v324, %v330
        %v333 = vadd.f32 %v325, %v331
        %v334 = vtanh.pop %v332
        %v335 = vtanh.pop %v333
        %337 = vset.pattern.permute.xlu0 0
        %338 = vperm.xlu0 %337, %v311
        %v339 = vpop.permute.xlu0 %338
        %v341 = vmul.f32 %v334, %v339
        %v342 = vmul.f32 %v335, %v339
        %v343 = vadd.f32 %v307, %v341
        %v344 = vadd.f32 %v308, %v342
        %v345 = vld [vmem:[%s1 + $0x10] sm:$0xff]
        %v346 = vld [vmem:[%s2 + $0x10] sm:$0xff]
        %v347 = vld [vmem:[%s3 + $0x10] sm:$0xff]
        %349 = vset.pattern.permute.xlu0 0
        %350 = vperm.xlu0 %349, %v346
        %v351 = vpop.permute.xlu0 %350
        %354 = vset.pattern.permute.xlu0 0
        %355 = vperm.xlu0 %354, %v345
        %v356 = vpop.permute.xlu0 %355
        %v358 = vmul.f32 %v356, %v253
        %v359 = vmul.f32 %v356, %v257
        %v360 = vadd.f32 %v351, %v358
        %v361 = vadd.f32 %v351, %v359
        %362 = vset.pattern.permute.xlu0 1
        %363 = vperm.xlu0 %362, %v345
        %v364 = vpop.permute.xlu0 %363
        %v366 = vmul.f32 %v364, %v266
        %v367 = vmul.f32 %v364, %v270
        %v368 = vadd.f32 %v360, %v366
        %v369 = vadd.f32 %v361, %v367
        %v370 = vtanh.pop %v368
        %v371 = vtanh.pop %v369
        %373 = vset.pattern.permute.xlu0 0
        %374 = vperm.xlu0 %373, %v347
        %v375 = vpop.permute.xlu0 %374
        %v377 = vmul.f32 %v370, %v375
        %v378 = vmul.f32 %v371, %v375
        %v379 = vadd.f32 %v343, %v377
        %v380 = vadd.f32 %v344, %v378
        %v381 = vld [vmem:[%s1 + $0x18] sm:$0xff]
        %v382 = vld [vmem:[%s2 + $0x18] sm:$0xff]
        %v383 = vld [vmem:[%s3 + $0x18] sm:$0xff]
        %385 = vset.pattern.permute.xlu0 0
        %386 = vperm.xlu0 %385, %v382
        %v387 = vpop.permute.xlu0 %386
        %390 = vset.pattern.permute.xlu0 0
        %391 = vperm.xlu0 %390, %v381
        %v392 = vpop.permute.xlu0 %391
        %v394 = vmul.f32 %v392, %v253
        %v395 = vmul.f32 %v392, %v257
        %v396 = vadd.f32 %v387, %v394
        %v397 = vadd.f32 %v387, %v395
        %398 = vset.pattern.permute.xlu0 1
        %399 = vperm.xlu0 %398, %v381
        %v400 = vpop.permute.xlu0 %399
        %v402 = vmul.f32 %v400, %v266
        %v403 = vmul.f32 %v400, %v270
        %v404 = vadd.f32 %v396, %v402
        %v405 = vadd.f32 %v397, %v403
        %v406 = vtanh.pop %v404
        %v407 = vtanh.pop %v405
        %409 = vset.pattern.permute.xlu0 0
        %410 = vperm.xlu0 %409, %v383
        %v411 = vpop.permute.xlu0 %410
        %v413 = vmul.f32 %v406, %v411
        %v414 = vmul.f32 %v407, %v411
        %v415 = vadd.f32 %v379, %v413
        %v416 = vadd.f32 %v380, %v414
        %v417 = vld [vmem:[%s1 + $0x20] sm:$0xff]
        %v418 = vld [vmem:[%s2 + $0x20] sm:$0xff]
        %v419 = vld [vmem:[%s3 + $0x20] sm:$0xff]
        %421 = vset.pattern.permute.xlu0 0
        %422 = vperm.xlu0 %421, %v418
        %v423 = vpop.permute.xlu0 %422
        %426 = vset.pattern.permute.xlu0 0
        %427 = vperm.xlu0 %426, %v417
        %v428 = vpop.permute.xlu0 %427
        %v430 = vmul.f32 %v428, %v253
        %v431 = vmul.f32 %v428, %v257
        %v432 = vadd.f32 %v423, %v430
        %v433 = vadd.f32 %v423, %v431
        %434 = vset.pattern.permute.xlu0 1
        %435 = vperm.xlu0 %434, %v417
        %v436 = vpop.permute.xlu0 %435
        %v438 = vmul.f32 %v436, %v266
        %v439 = vmul.f32 %v436, %v270
        %v440 = vadd.f32 %v432, %v438
        %v441 = vadd.f32 %v433, %v439
        %v442 = vtanh.pop %v440
        %v443 = vtanh.pop %v441
        %445 = vset.pattern.permute.xlu0 0
        %446 = vperm.xlu0 %445, %v419
        %v447 = vpop.permute.xlu0 %446
        %v449 = vmul.f32 %v442, %v447
        %v450 = vmul.f32 %v443, %v447
        %v451 = vadd.f32 %v415, %v449
        %v452 = vadd.f32 %v416, %v450
        %v453 = vld [vmem:[%s1 + $0x28] sm:$0xff]
        %v454 = vld [vmem:[%s2 + $0x28] sm:$0xff]
        %v455 = vld [vmem:[%s3 + $0x28] sm:$0xff]
        %457 = vset.pattern.permute.xlu0 0
        %458 = vperm.xlu0 %457, %v454
        %v459 = vpop.permute.xlu0 %458
        %462 = vset.pattern.permute.xlu0 0
        %463 = vperm.xlu0 %462, %v453
        %v464 = vpop.permute.xlu0 %463
        %v466 = vmul.f32 %v464, %v253
        %v467 = vmul.f32 %v464, %v257
        %v468 = vadd.f32 %v459, %v466
        %v469 = vadd.f32 %v459, %v467
        %470 = vset.pattern.permute.xlu0 1
        %471 = vperm.xlu0 %470, %v453
        %v472 = vpop.permute.xlu0 %471
        %v474 = vmul.f32 %v472, %v266
        %v475 = vmul.f32 %v472, %v270
        %v476 = vadd.f32 %v468, %v474
        %v477 = vadd.f32 %v469, %v475
        %v478 = vtanh.pop %v476
        %v479 = vtanh.pop %v477
        %481 = vset.pattern.permute.xlu0 0
        %482 = vperm.xlu0 %481, %v455
        %v483 = vpop.permute.xlu0 %482
        %v485 = vmul.f32 %v478, %v483
        %v486 = vmul.f32 %v479, %v483
        %v487 = vadd.f32 %v451, %v485
        %v488 = vadd.f32 %v452, %v486
        %v489 = vld [vmem:[%s1 + $0x30] sm:$0xff]
        %v490 = vld [vmem:[%s2 + $0x30] sm:$0xff]
        %v491 = vld [vmem:[%s3 + $0x30] sm:$0xff]
        %493 = vset.pattern.permute.xlu0 0
        %494 = vperm.xlu0 %493, %v490
        %v495 = vpop.permute.xlu0 %494
        %498 = vset.pattern.permute.xlu0 0
        %499 = vperm.xlu0 %498, %v489
        %v500 = vpop.permute.xlu0 %499
        %v502 = vmul.f32 %v500, %v253
        %v503 = vmul.f32 %v500, %v257
        %v504 = vadd.f32 %v495, %v502
        %v505 = vadd.f32 %v495, %v503
        %506 = vset.pattern.permute.xlu0 1
        %507 = vperm.xlu0 %506, %v489
        %v508 = vpop.permute.xlu0 %507
        %v510 = vmul.f32 %v508, %v266
        %v511 = vmul.f32 %v508, %v270
        %v512 = vadd.f32 %v504, %v510
        %v513 = vadd.f32 %v505, %v511
        %v514 = vtanh.pop %v512
        %v515 = vtanh.pop %v513
        %517 = vset.pattern.permute.xlu0 0
        %518 = vperm.xlu0 %517, %v491
        %v519 = vpop.permute.xlu0 %518
        %v521 = vmul.f32 %v514, %v519
        %v522 = vmul.f32 %v515, %v519
        %v523 = vadd.f32 %v487, %v521
        %v524 = vadd.f32 %v488, %v522
        %v525 = vld [vmem:[%s1 + $0x38] sm:$0xff]
        %v526 = vld [vmem:[%s2 + $0x38] sm:$0xff]
        %v527 = vld [vmem:[%s3 + $0x38] sm:$0xff]
        %529 = vset.pattern.permute.xlu0 0
        %530 = vperm.xlu0 %529, %v526
        %v531 = vpop.permute.xlu0 %530
        %534 = vset.pattern.permute.xlu0 0
        %535 = vperm.xlu0 %534, %v525
        %v536 = vpop.permute.xlu0 %535
        %v538 = vmul.f32 %v536, %v253
        %v539 = vmul.f32 %v536, %v257
        %v540 = vadd.f32 %v531, %v538
        %v541 = vadd.f32 %v531, %v539
        %542 = vset.pattern.permute.xlu0 1
        %543 = vperm.xlu0 %542, %v525
        %v544 = vpop.permute.xlu0 %543
        %v546 = vmul.f32 %v544, %v266
        %v547 = vmul.f32 %v544, %v270
        %v548 = vadd.f32 %v540, %v546
        %v549 = vadd.f32 %v541, %v547
        %v550 = vtanh.pop %v548
        %v551 = vtanh.pop %v549
        %553 = vset.pattern.permute.xlu0 0
        %554 = vperm.xlu0 %553, %v527
        %v555 = vpop.permute.xlu0 %554
        %v557 = vmul.f32 %v550, %v555
        %v558 = vmul.f32 %v551, %v555
        %v559 = vadd.f32 %v523, %v557
        %v560 = vadd.f32 %v524, %v558
        %v561 = vld [vmem:[%s1 + $0x40] sm:$0xff]
        %v562 = vld [vmem:[%s2 + $0x40] sm:$0xff]
        %v563 = vld [vmem:[%s3 + $0x40] sm:$0xff]
        %565 = vset.pattern.permute.xlu0 0
        %566 = vperm.xlu0 %565, %v562
        %v567 = vpop.permute.xlu0 %566
        %570 = vset.pattern.permute.xlu0 0
        %571 = vperm.xlu0 %570, %v561
        %v572 = vpop.permute.xlu0 %571
        %v574 = vmul.f32 %v572, %v253
        %v575 = vmul.f32 %v572, %v257
        %v576 = vadd.f32 %v567, %v574
        %v577 = vadd.f32 %v567, %v575
        %578 = vset.pattern.permute.xlu0 1
        %579 = vperm.xlu0 %578, %v561
        %v580 = vpop.permute.xlu0 %579
        %v582 = vmul.f32 %v580, %v266
        %v583 = vmul.f32 %v580, %v270
        %v584 = vadd.f32 %v576, %v582
        %v585 = vadd.f32 %v577, %v583
        %v586 = vtanh.pop %v584
        %v587 = vtanh.pop %v585
        %589 = vset.pattern.permute.xlu0 0
        %590 = vperm.xlu0 %589, %v563
        %v591 = vpop.permute.xlu0 %590
        %v593 = vmul.f32 %v586, %v591
        %v594 = vmul.f32 %v587, %v591
        %v595 = vadd.f32 %v559, %v593
        %v596 = vadd.f32 %v560, %v594
        %v597 = vld [vmem:[%s1 + $0x48] sm:$0xff]
        %v598 = vld [vmem:[%s2 + $0x48] sm:$0xff]
        %v599 = vld [vmem:[%s3 + $0x48] sm:$0xff]
        %601 = vset.pattern.permute.xlu0 0
        %602 = vperm.xlu0 %601, %v598
        %v603 = vpop.permute.xlu0 %602
        %606 = vset.pattern.permute.xlu0 0
        %607 = vperm.xlu0 %606, %v597
        %v608 = vpop.permute.xlu0 %607
        %v610 = vmul.f32 %v608, %v253
        %v611 = vmul.f32 %v608, %v257
        %v612 = vadd.f32 %v603, %v610
        %v613 = vadd.f32 %v603, %v611
        %614 = vset.pattern.permute.xlu0 1
        %615 = vperm.xlu0 %614, %v597
        %v616 = vpop.permute.xlu0 %615
        %v618 = vmul.f32 %v616, %v266
        %v619 = vmul.f32 %v616, %v270
        %v620 = vadd.f32 %v612, %v618
        %v621 = vadd.f32 %v613, %v619
        %v622 = vtanh.pop %v620
        %v623 = vtanh.pop %v621
        %625 = vset.pattern.permute.xlu0 0
        %626 = vperm.xlu0 %625, %v599
        %v627 = vpop.permute.xlu0 %626
        %v629 = vmul.f32 %v622, %v627
        %v630 = vmul.f32 %v623, %v627
        %v631 = vadd.f32 %v595, %v629
        %v632 = vadd.f32 %v596, %v630
        %v633 = vld [vmem:[%s1 + $0x50] sm:$0xff]
        %v634 = vld [vmem:[%s2 + $0x50] sm:$0xff]
        %v635 = vld [vmem:[%s3 + $0x50] sm:$0xff]
        %637 = vset.pattern.permute.xlu0 0
        %638 = vperm.xlu0 %637, %v634
        %v639 = vpop.permute.xlu0 %638
        %642 = vset.pattern.permute.xlu0 0
        %643 = vperm.xlu0 %642, %v633
        %v644 = vpop.permute.xlu0 %643
        %v646 = vmul.f32 %v644, %v253
        %v647 = vmul.f32 %v644, %v257
        %v648 = vadd.f32 %v639, %v646
        %v649 = vadd.f32 %v639, %v647
        %650 = vset.pattern.permute.xlu0 1
        %651 = vperm.xlu0 %650, %v633
        %v652 = vpop.permute.xlu0 %651
        %v654 = vmul.f32 %v652, %v266
        %v655 = vmul.f32 %v652, %v270
        %v656 = vadd.f32 %v648, %v654
        %v657 = vadd.f32 %v649, %v655
        %v658 = vtanh.pop %v656
        %v659 = vtanh.pop %v657
        %661 = vset.pattern.permute.xlu0 0
        %662 = vperm.xlu0 %661, %v635
        %v663 = vpop.permute.xlu0 %662
        %v665 = vmul.f32 %v658, %v663
        %v666 = vmul.f32 %v659, %v663
        %v667 = vadd.f32 %v631, %v665
        %v668 = vadd.f32 %v632, %v666
        %v669 = vld [vmem:[%s1 + $0x58] sm:$0xff]
        %v670 = vld [vmem:[%s2 + $0x58] sm:$0xff]
        %v671 = vld [vmem:[%s3 + $0x58] sm:$0xff]
        %673 = vset.pattern.permute.xlu0 0
        %674 = vperm.xlu0 %673, %v670
        %v675 = vpop.permute.xlu0 %674
        %678 = vset.pattern.permute.xlu0 0
        %679 = vperm.xlu0 %678, %v669
        %v680 = vpop.permute.xlu0 %679
        %v682 = vmul.f32 %v680, %v253
        %v683 = vmul.f32 %v680, %v257
        %v684 = vadd.f32 %v675, %v682
        %v685 = vadd.f32 %v675, %v683
        %686 = vset.pattern.permute.xlu0 1
        %687 = vperm.xlu0 %686, %v669
        %v688 = vpop.permute.xlu0 %687
        %v690 = vmul.f32 %v688, %v266
        %v691 = vmul.f32 %v688, %v270
        %v692 = vadd.f32 %v684, %v690
        %v693 = vadd.f32 %v685, %v691
        %v694 = vtanh.pop %v692
        %v695 = vtanh.pop %v693
        %697 = vset.pattern.permute.xlu0 0
        %698 = vperm.xlu0 %697, %v671
        %v699 = vpop.permute.xlu0 %698
        %v701 = vmul.f32 %v694, %v699
        %v702 = vmul.f32 %v695, %v699
        %v703 = vadd.f32 %v667, %v701
        %v704 = vadd.f32 %v668, %v702
        %v705 = vld [vmem:[%s1 + $0x60] sm:$0xff]
        %v706 = vld [vmem:[%s2 + $0x60] sm:$0xff]
        %v707 = vld [vmem:[%s3 + $0x60] sm:$0xff]
        %709 = vset.pattern.permute.xlu0 0
        %710 = vperm.xlu0 %709, %v706
        %v711 = vpop.permute.xlu0 %710
        %714 = vset.pattern.permute.xlu0 0
        %715 = vperm.xlu0 %714, %v705
        %v716 = vpop.permute.xlu0 %715
        %v718 = vmul.f32 %v716, %v253
        %v719 = vmul.f32 %v716, %v257
        %v720 = vadd.f32 %v711, %v718
        %v721 = vadd.f32 %v711, %v719
        %722 = vset.pattern.permute.xlu0 1
        %723 = vperm.xlu0 %722, %v705
        %v724 = vpop.permute.xlu0 %723
        %v726 = vmul.f32 %v724, %v266
        %v727 = vmul.f32 %v724, %v270
        %v728 = vadd.f32 %v720, %v726
        %v729 = vadd.f32 %v721, %v727
        %v730 = vtanh.pop %v728
        %v731 = vtanh.pop %v729
        %733 = vset.pattern.permute.xlu0 0
        %734 = vperm.xlu0 %733, %v707
        %v735 = vpop.permute.xlu0 %734
        %v737 = vmul.f32 %v730, %v735
        %v738 = vmul.f32 %v731, %v735
        %v739 = vadd.f32 %v703, %v737
        %v740 = vadd.f32 %v704, %v738
        %v741 = vld [vmem:[%s1 + $0x68] sm:$0xff]
        %v742 = vld [vmem:[%s2 + $0x68] sm:$0xff]
        %v743 = vld [vmem:[%s3 + $0x68] sm:$0xff]
        %745 = vset.pattern.permute.xlu0 0
        %746 = vperm.xlu0 %745, %v742
        %v747 = vpop.permute.xlu0 %746
        %750 = vset.pattern.permute.xlu0 0
        %751 = vperm.xlu0 %750, %v741
        %v752 = vpop.permute.xlu0 %751
        %v754 = vmul.f32 %v752, %v253
        %v755 = vmul.f32 %v752, %v257
        %v756 = vadd.f32 %v747, %v754
        %v757 = vadd.f32 %v747, %v755
        %758 = vset.pattern.permute.xlu0 1
        %759 = vperm.xlu0 %758, %v741
        %v760 = vpop.permute.xlu0 %759
        %v762 = vmul.f32 %v760, %v266
        %v763 = vmul.f32 %v760, %v270
        %v764 = vadd.f32 %v756, %v762
        %v765 = vadd.f32 %v757, %v763
        %v766 = vtanh.pop %v764
        %v767 = vtanh.pop %v765
        %769 = vset.pattern.permute.xlu0 0
        %770 = vperm.xlu0 %769, %v743
        %v771 = vpop.permute.xlu0 %770
        %v773 = vmul.f32 %v766, %v771
        %v774 = vmul.f32 %v767, %v771
        %v775 = vadd.f32 %v739, %v773
        %v776 = vadd.f32 %v740, %v774
        %v777 = vld [vmem:[%s1 + $0x70] sm:$0xff]
        %v778 = vld [vmem:[%s2 + $0x70] sm:$0xff]
        %v779 = vld [vmem:[%s3 + $0x70] sm:$0xff]
        %781 = vset.pattern.permute.xlu0 0
        %782 = vperm.xlu0 %781, %v778
        %v783 = vpop.permute.xlu0 %782
        %786 = vset.pattern.permute.xlu0 0
        %787 = vperm.xlu0 %786, %v777
        %v788 = vpop.permute.xlu0 %787
        %v790 = vmul.f32 %v788, %v253
        %v791 = vmul.f32 %v788, %v257
        %v792 = vadd.f32 %v783, %v790
        %v793 = vadd.f32 %v783, %v791
        %794 = vset.pattern.permute.xlu0 1
        %795 = vperm.xlu0 %794, %v777
        %v796 = vpop.permute.xlu0 %795
        %v798 = vmul.f32 %v796, %v266
        %v799 = vmul.f32 %v796, %v270
        %v800 = vadd.f32 %v792, %v798
        %v801 = vadd.f32 %v793, %v799
        %v802 = vtanh.pop %v800
        %v803 = vtanh.pop %v801
        %805 = vset.pattern.permute.xlu0 0
        %806 = vperm.xlu0 %805, %v779
        %v807 = vpop.permute.xlu0 %806
        %v809 = vmul.f32 %v802, %v807
        %v810 = vmul.f32 %v803, %v807
        %v811 = vadd.f32 %v775, %v809
        %v812 = vadd.f32 %v776, %v810
        %v813 = vld [vmem:[%s1 + $0x78] sm:$0xff]
        %v814 = vld [vmem:[%s2 + $0x78] sm:$0xff]
        %v815 = vld [vmem:[%s3 + $0x78] sm:$0xff]
        %817 = vset.pattern.permute.xlu0 0
        %818 = vperm.xlu0 %817, %v814
        %v819 = vpop.permute.xlu0 %818
        %822 = vset.pattern.permute.xlu0 0
        %823 = vperm.xlu0 %822, %v813
        %v824 = vpop.permute.xlu0 %823
        %v826 = vmul.f32 %v824, %v253
        %v827 = vmul.f32 %v824, %v257
        %v828 = vadd.f32 %v819, %v826
        %v829 = vadd.f32 %v819, %v827
        %830 = vset.pattern.permute.xlu0 1
        %831 = vperm.xlu0 %830, %v813
        %v832 = vpop.permute.xlu0 %831
        %v834 = vmul.f32 %v832, %v266
        %v835 = vmul.f32 %v832, %v270
        %v836 = vadd.f32 %v828, %v834
        %v837 = vadd.f32 %v829, %v835
        %v838 = vtanh.pop %v836
        %v839 = vtanh.pop %v837
        %841 = vset.pattern.permute.xlu0 0
        %842 = vperm.xlu0 %841, %v815
        %v843 = vpop.permute.xlu0 %842
        %v845 = vmul.f32 %v838, %v843
        %v846 = vmul.f32 %v839, %v843
        %v847 = vadd.f32 %v811, %v845
        %v848 = vadd.f32 %v812, %v846
        %v849 = vld [vmem:[%s1 + $0x80] sm:$0xff]
        %v850 = vld [vmem:[%s2 + $0x80] sm:$0xff]
        %v851 = vld [vmem:[%s3 + $0x80] sm:$0xff]
        %853 = vset.pattern.permute.xlu0 0
        %854 = vperm.xlu0 %853, %v850
        %v855 = vpop.permute.xlu0 %854
        %858 = vset.pattern.permute.xlu0 0
        %859 = vperm.xlu0 %858, %v849
        %v860 = vpop.permute.xlu0 %859
        %v862 = vmul.f32 %v860, %v253
        %v863 = vmul.f32 %v860, %v257
        %v864 = vadd.f32 %v855, %v862
        %v865 = vadd.f32 %v855, %v863
        %866 = vset.pattern.permute.xlu0 1
        %867 = vperm.xlu0 %866, %v849
        %v868 = vpop.permute.xlu0 %867
        %v870 = vmul.f32 %v868, %v266
        %v871 = vmul.f32 %v868, %v270
        %v872 = vadd.f32 %v864, %v870
        %v873 = vadd.f32 %v865, %v871
        %v874 = vtanh.pop %v872
        %v875 = vtanh.pop %v873
        %877 = vset.pattern.permute.xlu0 0
        %878 = vperm.xlu0 %877, %v851
        %v879 = vpop.permute.xlu0 %878
        %v881 = vmul.f32 %v874, %v879
        %v882 = vmul.f32 %v875, %v879
        %v883 = vadd.f32 %v847, %v881
        %v884 = vadd.f32 %v848, %v882
        %v885 = vld [vmem:[%s1 + $0x88] sm:$0xff]
        %v886 = vld [vmem:[%s2 + $0x88] sm:$0xff]
        %v887 = vld [vmem:[%s3 + $0x88] sm:$0xff]
        %889 = vset.pattern.permute.xlu0 0
        %890 = vperm.xlu0 %889, %v886
        %v891 = vpop.permute.xlu0 %890
        %894 = vset.pattern.permute.xlu0 0
        %895 = vperm.xlu0 %894, %v885
        %v896 = vpop.permute.xlu0 %895
        %v898 = vmul.f32 %v896, %v253
        %v899 = vmul.f32 %v896, %v257
        %v900 = vadd.f32 %v891, %v898
        %v901 = vadd.f32 %v891, %v899
        %902 = vset.pattern.permute.xlu0 1
        %903 = vperm.xlu0 %902, %v885
        %v904 = vpop.permute.xlu0 %903
        %v906 = vmul.f32 %v904, %v266
        %v907 = vmul.f32 %v904, %v270
        %v908 = vadd.f32 %v900, %v906
        %v909 = vadd.f32 %v901, %v907
        %v910 = vtanh.pop %v908
        %v911 = vtanh.pop %v909
        %913 = vset.pattern.permute.xlu0 0
        %914 = vperm.xlu0 %913, %v887
        %v915 = vpop.permute.xlu0 %914
        %v917 = vmul.f32 %v910, %v915
        %v918 = vmul.f32 %v911, %v915
        %v919 = vadd.f32 %v883, %v917
        %v920 = vadd.f32 %v884, %v918
        %v921 = vld [vmem:[%s1 + $0x90] sm:$0xff]
        %v922 = vld [vmem:[%s2 + $0x90] sm:$0xff]
        %v923 = vld [vmem:[%s3 + $0x90] sm:$0xff]
        %925 = vset.pattern.permute.xlu0 0
        %926 = vperm.xlu0 %925, %v922
        %v927 = vpop.permute.xlu0 %926
        %930 = vset.pattern.permute.xlu0 0
        %931 = vperm.xlu0 %930, %v921
        %v932 = vpop.permute.xlu0 %931
        %v934 = vmul.f32 %v932, %v253
        %v935 = vmul.f32 %v932, %v257
        %v936 = vadd.f32 %v927, %v934
        %v937 = vadd.f32 %v927, %v935
        %938 = vset.pattern.permute.xlu0 1
        %939 = vperm.xlu0 %938, %v921
        %v940 = vpop.permute.xlu0 %939
        %v942 = vmul.f32 %v940, %v266
        %v943 = vmul.f32 %v940, %v270
        %v944 = vadd.f32 %v936, %v942
        %v945 = vadd.f32 %v937, %v943
        %v946 = vtanh.pop %v944
        %v947 = vtanh.pop %v945
        %949 = vset.pattern.permute.xlu0 0
        %950 = vperm.xlu0 %949, %v923
        %v951 = vpop.permute.xlu0 %950
        %v953 = vmul.f32 %v946, %v951
        %v954 = vmul.f32 %v947, %v951
        %v955 = vadd.f32 %v919, %v953
        %v956 = vadd.f32 %v920, %v954
        %v957 = vld [vmem:[%s1 + $0x98] sm:$0xff]
        %v958 = vld [vmem:[%s2 + $0x98] sm:$0xff]
        %v959 = vld [vmem:[%s3 + $0x98] sm:$0xff]
        %961 = vset.pattern.permute.xlu0 0
        %962 = vperm.xlu0 %961, %v958
        %v963 = vpop.permute.xlu0 %962
        %966 = vset.pattern.permute.xlu0 0
        %967 = vperm.xlu0 %966, %v957
        %v968 = vpop.permute.xlu0 %967
        %v970 = vmul.f32 %v968, %v253
        %v971 = vmul.f32 %v968, %v257
        %v972 = vadd.f32 %v963, %v970
        %v973 = vadd.f32 %v963, %v971
        %974 = vset.pattern.permute.xlu0 1
        %975 = vperm.xlu0 %974, %v957
        %v976 = vpop.permute.xlu0 %975
        %v978 = vmul.f32 %v976, %v266
        %v979 = vmul.f32 %v976, %v270
        %v980 = vadd.f32 %v972, %v978
        %v981 = vadd.f32 %v973, %v979
        %v982 = vtanh.pop %v980
        %v983 = vtanh.pop %v981
        %985 = vset.pattern.permute.xlu0 0
        %986 = vperm.xlu0 %985, %v959
        %v987 = vpop.permute.xlu0 %986
        %v989 = vmul.f32 %v982, %v987
        %v990 = vmul.f32 %v983, %v987
        %v991 = vadd.f32 %v955, %v989
        %v992 = vadd.f32 %v956, %v990
        %v993 = vld [vmem:[%s1 + $0xa0] sm:$0xff]
        %v994 = vld [vmem:[%s2 + $0xa0] sm:$0xff]
        %v995 = vld [vmem:[%s3 + $0xa0] sm:$0xff]
        %997 = vset.pattern.permute.xlu0 0
        %998 = vperm.xlu0 %997, %v994
        %v999 = vpop.permute.xlu0 %998
        %1002 = vset.pattern.permute.xlu0 0
        %1003 = vperm.xlu0 %1002, %v993
        %v1004 = vpop.permute.xlu0 %1003
        %v1006 = vmul.f32 %v1004, %v253
        %v1007 = vmul.f32 %v1004, %v257
        %v1008 = vadd.f32 %v999, %v1006
        %v1009 = vadd.f32 %v999, %v1007
        %1010 = vset.pattern.permute.xlu0 1
        %1011 = vperm.xlu0 %1010, %v993
        %v1012 = vpop.permute.xlu0 %1011
        %v1014 = vmul.f32 %v1012, %v266
        %v1015 = vmul.f32 %v1012, %v270
        %v1016 = vadd.f32 %v1008, %v1014
        %v1017 = vadd.f32 %v1009, %v1015
        %v1018 = vtanh.pop %v1016
        %v1019 = vtanh.pop %v1017
        %1021 = vset.pattern.permute.xlu0 0
        %1022 = vperm.xlu0 %1021, %v995
        %v1023 = vpop.permute.xlu0 %1022
        %v1025 = vmul.f32 %v1018, %v1023
        %v1026 = vmul.f32 %v1019, %v1023
        %v1027 = vadd.f32 %v991, %v1025
        %v1028 = vadd.f32 %v992, %v1026
        %v1029 = vld [vmem:[%s1 + $0xa8] sm:$0xff]
        %v1030 = vld [vmem:[%s2 + $0xa8] sm:$0xff]
        %v1031 = vld [vmem:[%s3 + $0xa8] sm:$0xff]
        %1033 = vset.pattern.permute.xlu0 0
        %1034 = vperm.xlu0 %1033, %v1030
        %v1035 = vpop.permute.xlu0 %1034
        %1038 = vset.pattern.permute.xlu0 0
        %1039 = vperm.xlu0 %1038, %v1029
        %v1040 = vpop.permute.xlu0 %1039
        %v1042 = vmul.f32 %v1040, %v253
        %v1043 = vmul.f32 %v1040, %v257
        %v1044 = vadd.f32 %v1035, %v1042
        %v1045 = vadd.f32 %v1035, %v1043
        %1046 = vset.pattern.permute.xlu0 1
        %1047 = vperm.xlu0 %1046, %v1029
        %v1048 = vpop.permute.xlu0 %1047
        %v1050 = vmul.f32 %v1048, %v266
        %v1051 = vmul.f32 %v1048, %v270
        %v1052 = vadd.f32 %v1044, %v1050
        %v1053 = vadd.f32 %v1045, %v1051
        %v1054 = vtanh.pop %v1052
        %v1055 = vtanh.pop %v1053
        %1057 = vset.pattern.permute.xlu0 0
        %1058 = vperm.xlu0 %1057, %v1031
        %v1059 = vpop.permute.xlu0 %1058
        %v1061 = vmul.f32 %v1054, %v1059
        %v1062 = vmul.f32 %v1055, %v1059
        %v1063 = vadd.f32 %v1027, %v1061
        %v1064 = vadd.f32 %v1028, %v1062
        %v1065 = vld [vmem:[%s1 + $0xb0] sm:$0xff]
        %v1066 = vld [vmem:[%s2 + $0xb0] sm:$0xff]
        %v1067 = vld [vmem:[%s3 + $0xb0] sm:$0xff]
        %1069 = vset.pattern.permute.xlu0 0
        %1070 = vperm.xlu0 %1069, %v1066
        %v1071 = vpop.permute.xlu0 %1070
        %1074 = vset.pattern.permute.xlu0 0
        %1075 = vperm.xlu0 %1074, %v1065
        %v1076 = vpop.permute.xlu0 %1075
        %v1078 = vmul.f32 %v1076, %v253
        %v1079 = vmul.f32 %v1076, %v257
        %v1080 = vadd.f32 %v1071, %v1078
        %v1081 = vadd.f32 %v1071, %v1079
        %1082 = vset.pattern.permute.xlu0 1
        %1083 = vperm.xlu0 %1082, %v1065
        %v1084 = vpop.permute.xlu0 %1083
        %v1086 = vmul.f32 %v1084, %v266
        %v1087 = vmul.f32 %v1084, %v270
        %v1088 = vadd.f32 %v1080, %v1086
        %v1089 = vadd.f32 %v1081, %v1087
        %v1090 = vtanh.pop %v1088
        %v1091 = vtanh.pop %v1089
        %1093 = vset.pattern.permute.xlu0 0
        %1094 = vperm.xlu0 %1093, %v1067
        %v1095 = vpop.permute.xlu0 %1094
        %v1097 = vmul.f32 %v1090, %v1095
        %v1098 = vmul.f32 %v1091, %v1095
        %v1099 = vadd.f32 %v1063, %v1097
        %v1100 = vadd.f32 %v1064, %v1098
        %v1101 = vld [vmem:[%s1 + $0xb8] sm:$0xff]
        %v1102 = vld [vmem:[%s2 + $0xb8] sm:$0xff]
        %v1103 = vld [vmem:[%s3 + $0xb8] sm:$0xff]
        %1105 = vset.pattern.permute.xlu0 0
        %1106 = vperm.xlu0 %1105, %v1102
        %v1107 = vpop.permute.xlu0 %1106
        %1110 = vset.pattern.permute.xlu0 0
        %1111 = vperm.xlu0 %1110, %v1101
        %v1112 = vpop.permute.xlu0 %1111
        %v1114 = vmul.f32 %v1112, %v253
        %v1115 = vmul.f32 %v1112, %v257
        %v1116 = vadd.f32 %v1107, %v1114
        %v1117 = vadd.f32 %v1107, %v1115
        %1118 = vset.pattern.permute.xlu0 1
        %1119 = vperm.xlu0 %1118, %v1101
        %v1120 = vpop.permute.xlu0 %1119
        %v1122 = vmul.f32 %v1120, %v266
        %v1123 = vmul.f32 %v1120, %v270
        %v1124 = vadd.f32 %v1116, %v1122
        %v1125 = vadd.f32 %v1117, %v1123
        %v1126 = vtanh.pop %v1124
        %v1127 = vtanh.pop %v1125
        %1129 = vset.pattern.permute.xlu0 0
        %1130 = vperm.xlu0 %1129, %v1103
        %v1131 = vpop.permute.xlu0 %1130
        %v1133 = vmul.f32 %v1126, %v1131
        %v1134 = vmul.f32 %v1127, %v1131
        %v1135 = vadd.f32 %v1099, %v1133
        %v1136 = vadd.f32 %v1100, %v1134
        %v1137 = vld [vmem:[%s1 + $0xc0] sm:$0xff]
        %v1138 = vld [vmem:[%s2 + $0xc0] sm:$0xff]
        %v1139 = vld [vmem:[%s3 + $0xc0] sm:$0xff]
        %1141 = vset.pattern.permute.xlu0 0
        %1142 = vperm.xlu0 %1141, %v1138
        %v1143 = vpop.permute.xlu0 %1142
        %1146 = vset.pattern.permute.xlu0 0
        %1147 = vperm.xlu0 %1146, %v1137
        %v1148 = vpop.permute.xlu0 %1147
        %v1150 = vmul.f32 %v1148, %v253
        %v1151 = vmul.f32 %v1148, %v257
        %v1152 = vadd.f32 %v1143, %v1150
        %v1153 = vadd.f32 %v1143, %v1151
        %1154 = vset.pattern.permute.xlu0 1
        %1155 = vperm.xlu0 %1154, %v1137
        %v1156 = vpop.permute.xlu0 %1155
        %v1158 = vmul.f32 %v1156, %v266
        %v1159 = vmul.f32 %v1156, %v270
        %v1160 = vadd.f32 %v1152, %v1158
        %v1161 = vadd.f32 %v1153, %v1159
        %v1162 = vtanh.pop %v1160
        %v1163 = vtanh.pop %v1161
        %1165 = vset.pattern.permute.xlu0 0
        %1166 = vperm.xlu0 %1165, %v1139
        %v1167 = vpop.permute.xlu0 %1166
        %v1169 = vmul.f32 %v1162, %v1167
        %v1170 = vmul.f32 %v1163, %v1167
        %v1171 = vadd.f32 %v1135, %v1169
        %v1172 = vadd.f32 %v1136, %v1170
        %v1173 = vrot.slane %v1171, 4
        %v1174 = vadd.f32 %v1171, %v1173
        %v1175 = vrot.slane %v1174, 2
        %v1176 = vadd.f32 %v1174, %v1175
        %v1177 = vrot.slane %v1176, 1
        %v1178 = vadd.f32 %v1176, %v1177
        %v1179 = vrot.slane %v1172, 4
        %v1180 = vadd.f32 %v1172, %v1179
        %v1181 = vrot.slane %v1180, 2
        %v1182 = vadd.f32 %v1180, %v1181
        %v1183 = vrot.slane %v1182, 1
        %v1184 = vadd.f32 %v1182, %v1183
        %v1185 = vld [vmem:[#allocation2] sm:$0x1]
        %1187 = vset.pattern.permute.xlu0 0
        %1188 = vperm.xlu0 %1187, %v1185
        %v1189 = vpop.permute.xlu0 %1188
        %v1191 = vlaneseq
        %v1192 = vshrl.u32 %v1191, 7
        %v1193 = vsub.s32 0, %v1192
        %v1194 = vrot.slane %v1189, %v1193
        %v1195 = vadd.f32 %v1178, %v1194
        %v1196 = vadd.f32 %v1184, %v1194
        %v1199 = vcombine.low %v1195, %v1196
        %v1201 = vunpack.c.l.s4 1966171168
        %v1202 = vunpack.c.0.s8 %v1201
        %v1203 = vlaneseq
        %v1204 = vshrl.u32 %v1203, 7
        %v1205 = vsub.s32 %v1202, %v1204
        %v1206 = vrot.slane %v1199, %v1205
        %v1208 = vunpack.c.l.s4 1966171168
        %v1209 = vunpack.c.0.s8 %v1208
        %v1210 = vlaneseq
        %v1211 = vshrl.u32 %v1210, 7
        %v1212 = vsub.s32 %v1209, %v1211
        %v1213 = vrot.slane %v1206, %v1212
        %v1215 = vlaneseq
        %vm1216 = vcmp.ge.s32.totalorder %v1215, 0
        %vm1217 = vcmp.lt.s32.totalorder %v1215, 256
        %vm1218 = vmand %vm1216, %vm1217
        %1219 = vst.msk [vmem:[%s228] sm:$0x3] %vm1218, %v1213
        %s1220 = sand.u32 %s136, 1
        %s1221 = sand.u32 %s136, 1
        %s1222 = smul.addr %s1221, 2
        %s1223 = scalar_lea.vmem [#allocation3], %s1222
        // Predicated region
        $region41: #{decoder_forward.1} parent=39 // pred_check
          %p1224 = pneg %p146
        $region42: #{decoder_forward.1} parent=39 // pred_check_branch
          %1226 = sbr.rel (%p1224) target = $region44
        $region43: #{decoder_forward.1} parent=39 // pred_region
          %s1227 = smul.u32 2, %s18
          %s1228 = ssub.s32 3, %s1227
          %p1229 = scmp.lt.s32.totalorder %s1228, 2
          %s1230 = scalar_select %p1229, %s1228, 2
          %s1231 = smul.u32 16, %s1230
          %p1232 = scmp.ne.s32.totalorder 0, %s1231
          %s1233 = scalar_lea.vmem %s5, %s1227
          // Predicated region
          $region45: #{decoder_forward.1} parent=43 // pred_check
            %p1234 = pneg %p1232
          $region46: #{decoder_forward.1} parent=43 // pred_check_branch
            %1236 = sbr.rel (%p1234) target = $region48
          $region47: #{decoder_forward.1} parent=43 // pred_region
            %p1237 = scmp.lt.u32.totalorder %s1230, 8
            %p1238 = pneg %p1237
            // Predicated region
            $region49: #{decoder_forward.1} parent=47 // pred_check
              _
            $region50: #{decoder_forward.1} parent=47 // pred_check_branch
              %1240 = sbr.rel (%p1237) target = $region52
            $region51: #{decoder_forward.1} parent=47 // pred_region
              %s1256 = sand.u32 %s1230, 7
              %p1257 = scmp.eq.s32.totalorder %s1256, 0
              // Predicated region
              $region64: #{decoder_forward.1} parent=51 // pred_check
                %p1258 = pneg %p1257
              $region65: #{decoder_forward.1} parent=51 // pred_check_branch
                %1260 = sbr.rel (%p1258) target = $region67
              $region66: #{decoder_forward.1} parent=51 // pred_region
                %s1261 = sshrl.u32 %s1230, 3
                %s1262 = sshrl.u32 %s1261, 6
                // While loop
                $region68: #{decoder_forward.1} parent=66 // loop_pre_header
                  _
                $region69: #{decoder_forward.1} parent=66 // loop_header
                  %s1266 = sphi 0, %s1268
                  %p1267 = scmp.ge.s32.totalorder %s1266, %s1262
                  %s1271 = sphi 0, %s1404
                  %s1272 = sphi %s1223, %s1407
                  %s1273 = sphi %s1233, %s1408
                $region70: #{decoder_forward.1} parent=66 // loop_header_branch
                  %1270 = sbr.rel (%p1267) target = $region74
                $region71: #{decoder_forward.1} parent=66 // loop_body
                  %v1274 = vld [vmem:[%s1272] sm:$0xff]
                  %1275 = vst [vmem:[%s1273] sm:$0xff] %v1274
                  %v1276 = vld [vmem:[%s1272 + $0x8] sm:$0xff]
                  %1277 = vst [vmem:[%s1273 + $0x8] sm:$0xff] %v1276
                  %v1278 = vld [vmem:[%s1272 + $0x10] sm:$0xff]
                  %1279 = vst [vmem:[%s1273 + $0x10] sm:$0xff] %v1278
                  %v1280 = vld [vmem:[%s1272 + $0x18] sm:$0xff]
                  %1281 = vst [vmem:[%s1273 + $0x18] sm:$0xff] %v1280
                  %v1282 = vld [vmem:[%s1272 + $0x20] sm:$0xff]
                  %1283 = vst [vmem:[%s1273 + $0x20] sm:$0xff] %v1282
                  %v1284 = vld [vmem:[%s1272 + $0x28] sm:$0xff]
                  %1285 = vst [vmem:[%s1273 + $0x28] sm:$0xff] %v1284
                  %v1286 = vld [vmem:[%s1272 + $0x30] sm:$0xff]
                  %1287 = vst [vmem:[%s1273 + $0x30] sm:$0xff] %v1286
                  %v1288 = vld [vmem:[%s1272 + $0x38] sm:$0xff]
                  %1289 = vst [vmem:[%s1273 + $0x38] sm:$0xff] %v1288
                  %v1290 = vld [vmem:[%s1272 + $0x40] sm:$0xff]
                  %1291 = vst [vmem:[%s1273 + $0x40] sm:$0xff] %v1290
                  %v1292 = vld [vmem:[%s1272 + $0x48] sm:$0xff]
                  %1293 = vst [vmem:[%s1273 + $0x48] sm:$0xff] %v1292
                  %v1294 = vld [vmem:[%s1272 + $0x50] sm:$0xff]
                  %1295 = vst [vmem:[%s1273 + $0x50] sm:$0xff] %v1294
                  %v1296 = vld [vmem:[%s1272 + $0x58] sm:$0xff]
                  %1297 = vst [vmem:[%s1273 + $0x58] sm:$0xff] %v1296
                  %v1298 = vld [vmem:[%s1272 + $0x60] sm:$0xff]
                  %1299 = vst [vmem:[%s1273 + $0x60] sm:$0xff] %v1298
                  %v1300 = vld [vmem:[%s1272 + $0x68] sm:$0xff]
                  %1301 = vst [vmem:[%s1273 + $0x68] sm:$0xff] %v1300
                  %v1302 = vld [vmem:[%s1272 + $0x70] sm:$0xff]
                  %1303 = vst [vmem:[%s1273 + $0x70] sm:$0xff] %v1302
                  %v1304 = vld [vmem:[%s1272 + $0x78] sm:$0xff]
                  %1305 = vst [vmem:[%s1273 + $0x78] sm:$0xff] %v1304
                  %v1306 = vld [vmem:[%s1272 + $0x80] sm:$0xff]
                  %1307 = vst [vmem:[%s1273 + $0x80] sm:$0xff] %v1306
                  %v1308 = vld [vmem:[%s1272 + $0x88] sm:$0xff]
                  %1309 = vst [vmem:[%s1273 + $0x88] sm:$0xff] %v1308
                  %v1310 = vld [vmem:[%s1272 + $0x90] sm:$0xff]
                  %1311 = vst [vmem:[%s1273 + $0x90] sm:$0xff] %v1310
                  %v1312 = vld [vmem:[%s1272 + $0x98] sm:$0xff]
                  %1313 = vst [vmem:[%s1273 + $0x98] sm:$0xff] %v1312
                  %v1314 = vld [vmem:[%s1272 + $0xa0] sm:$0xff]
                  %1315 = vst [vmem:[%s1273 + $0xa0] sm:$0xff] %v1314
                  %v1316 = vld [vmem:[%s1272 + $0xa8] sm:$0xff]
                  %1317 = vst [vmem:[%s1273 + $0xa8] sm:$0xff] %v1316
                  %v1318 = vld [vmem:[%s1272 + $0xb0] sm:$0xff]
                  %1319 = vst [vmem:[%s1273 + $0xb0] sm:$0xff] %v1318
                  %v1320 = vld [vmem:[%s1272 + $0xb8] sm:$0xff]
                  %1321 = vst [vmem:[%s1273 + $0xb8] sm:$0xff] %v1320
                  %v1322 = vld [vmem:[%s1272 + $0xc0] sm:$0xff]
                  %1323 = vst [vmem:[%s1273 + $0xc0] sm:$0xff] %v1322
                  %v1324 = vld [vmem:[%s1272 + $0xc8] sm:$0xff]
                  %1325 = vst [vmem:[%s1273 + $0xc8] sm:$0xff] %v1324
                  %v1326 = vld [vmem:[%s1272 + $0xd0] sm:$0xff]
                  %1327 = vst [vmem:[%s1273 + $0xd0] sm:$0xff] %v1326
                  %v1328 = vld [vmem:[%s1272 + $0xd8] sm:$0xff]
                  %1329 = vst [vmem:[%s1273 + $0xd8] sm:$0xff] %v1328
                  %v1330 = vld [vmem:[%s1272 + $0xe0] sm:$0xff]
                  %1331 = vst [vmem:[%s1273 + $0xe0] sm:$0xff] %v1330
                  %v1332 = vld [vmem:[%s1272 + $0xe8] sm:$0xff]
                  %1333 = vst [vmem:[%s1273 + $0xe8] sm:$0xff] %v1332
                  %v1334 = vld [vmem:[%s1272 + $0xf0] sm:$0xff]
                  %1335 = vst [vmem:[%s1273 + $0xf0] sm:$0xff] %v1334
                  %v1336 = vld [vmem:[%s1272 + $0xf8] sm:$0xff]
                  %1337 = vst [vmem:[%s1273 + $0xf8] sm:$0xff] %v1336
                  %v1338 = vld [vmem:[%s1272 + $0x100] sm:$0xff]
                  %1339 = vst [vmem:[%s1273 + $0x100] sm:$0xff] %v1338
                  %v1340 = vld [vmem:[%s1272 + $0x108] sm:$0xff]
                  %1341 = vst [vmem:[%s1273 + $0x108] sm:$0xff] %v1340
                  %v1342 = vld [vmem:[%s1272 + $0x110] sm:$0xff]
                  %1343 = vst [vmem:[%s1273 + $0x110] sm:$0xff] %v1342
                  %v1344 = vld [vmem:[%s1272 + $0x118] sm:$0xff]
                  %1345 = vst [vmem:[%s1273 + $0x118] sm:$0xff] %v1344
                  %v1346 = vld [vmem:[%s1272 + $0x120] sm:$0xff]
                  %1347 = vst [vmem:[%s1273 + $0x120] sm:$0xff] %v1346
                  %v1348 = vld [vmem:[%s1272 + $0x128] sm:$0xff]
                  %1349 = vst [vmem:[%s1273 + $0x128] sm:$0xff] %v1348
                  %v1350 = vld [vmem:[%s1272 + $0x130] sm:$0xff]
                  %1351 = vst [vmem:[%s1273 + $0x130] sm:$0xff] %v1350
                  %v1352 = vld [vmem:[%s1272 + $0x138] sm:$0xff]
                  %1353 = vst [vmem:[%s1273 + $0x138] sm:$0xff] %v1352
                  %v1354 = vld [vmem:[%s1272 + $0x140] sm:$0xff]
                  %1355 = vst [vmem:[%s1273 + $0x140] sm:$0xff] %v1354
                  %v1356 = vld [vmem:[%s1272 + $0x148] sm:$0xff]
                  %1357 = vst [vmem:[%s1273 + $0x148] sm:$0xff] %v1356
                  %v1358 = vld [vmem:[%s1272 + $0x150] sm:$0xff]
                  %1359 = vst [vmem:[%s1273 + $0x150] sm:$0xff] %v1358
                  %v1360 = vld [vmem:[%s1272 + $0x158] sm:$0xff]
                  %1361 = vst [vmem:[%s1273 + $0x158] sm:$0xff] %v1360
                  %v1362 = vld [vmem:[%s1272 + $0x160] sm:$0xff]
                  %1363 = vst [vmem:[%s1273 + $0x160] sm:$0xff] %v1362
                  %v1364 = vld [vmem:[%s1272 + $0x168] sm:$0xff]
                  %1365 = vst [vmem:[%s1273 + $0x168] sm:$0xff] %v1364
                  %v1366 = vld [vmem:[%s1272 + $0x170] sm:$0xff]
                  %1367 = vst [vmem:[%s1273 + $0x170] sm:$0xff] %v1366
                  %v1368 = vld [vmem:[%s1272 + $0x178] sm:$0xff]
                  %1369 = vst [vmem:[%s1273 + $0x178] sm:$0xff] %v1368
                  %v1370 = vld [vmem:[%s1272 + $0x180] sm:$0xff]
                  %1371 = vst [vmem:[%s1273 + $0x180] sm:$0xff] %v1370
                  %v1372 = vld [vmem:[%s1272 + $0x188] sm:$0xff]
                  %1373 = vst [vmem:[%s1273 + $0x188] sm:$0xff] %v1372
                  %v1374 = vld [vmem:[%s1272 + $0x190] sm:$0xff]
                  %1375 = vst [vmem:[%s1273 + $0x190] sm:$0xff] %v1374
                  %v1376 = vld [vmem:[%s1272 + $0x198] sm:$0xff]
                  %1377 = vst [vmem:[%s1273 + $0x198] sm:$0xff] %v1376
                  %v1378 = vld [vmem:[%s1272 + $0x1a0] sm:$0xff]
                  %1379 = vst [vmem:[%s1273 + $0x1a0] sm:$0xff] %v1378
                  %v1380 = vld [vmem:[%s1272 + $0x1a8] sm:$0xff]
                  %1381 = vst [vmem:[%s1273 + $0x1a8] sm:$0xff] %v1380
                  %v1382 = vld [vmem:[%s1272 + $0x1b0] sm:$0xff]
                  %1383 = vst [vmem:[%s1273 + $0x1b0] sm:$0xff] %v1382
                  %v1384 = vld [vmem:[%s1272 + $0x1b8] sm:$0xff]
                  %1385 = vst [vmem:[%s1273 + $0x1b8] sm:$0xff] %v1384
                  %v1386 = vld [vmem:[%s1272 + $0x1c0] sm:$0xff]
                  %1387 = vst [vmem:[%s1273 + $0x1c0] sm:$0xff] %v1386
                  %v1388 = vld [vmem:[%s1272 + $0x1c8] sm:$0xff]
                  %1389 = vst [vmem:[%s1273 + $0x1c8] sm:$0xff] %v1388
                  %v1390 = vld [vmem:[%s1272 + $0x1d0] sm:$0xff]
                  %1391 = vst [vmem:[%s1273 + $0x1d0] sm:$0xff] %v1390
                  %v1392 = vld [vmem:[%s1272 + $0x1d8] sm:$0xff]
                  %1393 = vst [vmem:[%s1273 + $0x1d8] sm:$0xff] %v1392
                  %v1394 = vld [vmem:[%s1272 + $0x1e0] sm:$0xff]
                  %1395 = vst [vmem:[%s1273 + $0x1e0] sm:$0xff] %v1394
                  %v1396 = vld [vmem:[%s1272 + $0x1e8] sm:$0xff]
                  %1397 = vst [vmem:[%s1273 + $0x1e8] sm:$0xff] %v1396
                  %v1398 = vld [vmem:[%s1272 + $0x1f0] sm:$0xff]
                  %1399 = vst [vmem:[%s1273 + $0x1f0] sm:$0xff] %v1398
                  %v1400 = vld [vmem:[%s1272 + $0x1f8] sm:$0xff]
                  %1401 = vst [vmem:[%s1273 + $0x1f8] sm:$0xff] %v1400
                  %s1402 = sadd.s32 1, %s1271
                  %p1403 = scmp.ge.s32.totalorder %s1402, %s1262
                  %s1404 = scalar_select %p1403, 0, %s1402
                  %s1405 = smul.u32 %s1404, 512
                  %s1406 = smul.u32 %s1404, 512
                  %s1407 = scalar_lea.vmem %s1223, %s1405 [#allocation3]
                  %s1408 = scalar_lea.vmem %s1233, %s1406
                $region72: #{decoder_forward.1} parent=66 // loop_footer
                  %s1268 = sadd.s32 %s1266, 1
                $region73: #{decoder_forward.1} parent=66 // loop_footer_branch
                  %1265 = sbr.rel target = $region69
                $region74: #{decoder_forward.1} parent=66 // loop_exit
                  _
                %s1409 = sshrl.u32 %s1261, 6
                %s1410 = sand.u32 %s1261, 63
                %s1411 = smul.u32 %s1409, 64
                %s1412 = smul.u32 128, %s1411
                %s1413 = sshra.s32 %s1412, 4
                %s1414 = scalar_lea.vmem %s1223, %s1413 [#allocation3]
                %s1415 = smul.u32 128, %s1411
                %s1416 = sshra.s32 %s1415, 4
                %s1417 = scalar_lea.vmem %s1233, %s1416
                // While loop
                $region75: #{decoder_forward.1} parent=66 // loop_pre_header
                  _
                $region76: #{decoder_forward.1} parent=66 // loop_header
                  %s1421 = sphi 0, %s1423
                  %p1422 = scmp.ge.s32.totalorder %s1421, %s1410
                  %s1426 = sphi 0, %s1433
                  %s1427 = sphi %s1414, %s1436
                  %s1428 = sphi %s1417, %s1437
                $region77: #{decoder_forward.1} parent=66 // loop_header_branch
                  %1425 = sbr.rel (%p1422) target = $region81
                $region78: #{decoder_forward.1} parent=66 // loop_body
                  %v1429 = vld [vmem:[%s1427] sm:$0xff]
                  %1430 = vst [vmem:[%s1428] sm:$0xff] %v1429
                  %s1431 = sadd.s32 1, %s1426
                  %p1432 = scmp.ge.s32.totalorder %s1431, %s1410
                  %s1433 = scalar_select %p1432, 0, %s1431
                  %s1434 = smul.u32 %s1433, 8
                  %s1435 = smul.u32 %s1433, 8
                  %s1436 = scalar_lea.vmem %s1414, %s1434 [#allocation3]
                  %s1437 = scalar_lea.vmem %s1417, %s1435
                $region79: #{decoder_forward.1} parent=66 // loop_footer
                  %s1423 = sadd.s32 %s1421, 1
                $region80: #{decoder_forward.1} parent=66 // loop_footer_branch
                  %1420 = sbr.rel target = $region76
                $region81: #{decoder_forward.1} parent=66 // loop_exit
                  _
              $region67: #{decoder_forward.1} parent=51 // pred_fallthru
                _
              %p1438 = pneg %p1257
              // Predicated region
              $region82: #{decoder_forward.1} parent=51 // pred_check
                _
              $region83: #{decoder_forward.1} parent=51 // pred_check_branch
                %1440 = sbr.rel (%p1257) target = $region85
              $region84: #{decoder_forward.1} parent=51 // pred_region
                %s1441 = sand.u32 %s1230, 7
                %s1442 = ssub.s32 %s1230, %s1441
                %s1443 = scalar_lea.vmem %s1223, %s1442 [#allocation3]
                %s1444 = ssub.s32 %s1230, %s1441
                %s1445 = scalar_lea.vmem %s1233, %s1444
                %s1446 = sshrl.u32 %s1230, 3
                %s1447 = sshrl.u32 %s1446, 6
                // While loop
                $region86: #{decoder_forward.1} parent=84 // loop_pre_header
                  _
                $region87: #{decoder_forward.1} parent=84 // loop_header
                  %s1451 = sphi 0, %s1453
                  %p1452 = scmp.ge.s32.totalorder %s1451, %s1447
                  %s1456 = sphi 0, %s1589
                  %s1457 = sphi %s1223, %s1592
                  %s1458 = sphi %s1233, %s1593
                $region88: #{decoder_forward.1} parent=84 // loop_header_branch
                  %1455 = sbr.rel (%p1452) target = $region92
                $region89: #{decoder_forward.1} parent=84 // loop_body
                  %v1459 = vld [vmem:[%s1457] sm:$0xff]
                  %1460 = vst [vmem:[%s1458] sm:$0xff] %v1459
                  %v1461 = vld [vmem:[%s1457 + $0x8] sm:$0xff]
                  %1462 = vst [vmem:[%s1458 + $0x8] sm:$0xff] %v1461
                  %v1463 = vld [vmem:[%s1457 + $0x10] sm:$0xff]
                  %1464 = vst [vmem:[%s1458 + $0x10] sm:$0xff] %v1463
                  %v1465 = vld [vmem:[%s1457 + $0x18] sm:$0xff]
                  %1466 = vst [vmem:[%s1458 + $0x18] sm:$0xff] %v1465
                  %v1467 = vld [vmem:[%s1457 + $0x20] sm:$0xff]
                  %1468 = vst [vmem:[%s1458 + $0x20] sm:$0xff] %v1467
                  %v1469 = vld [vmem:[%s1457 + $0x28] sm:$0xff]
                  %1470 = vst [vmem:[%s1458 + $0x28] sm:$0xff] %v1469
                  %v1471 = vld [vmem:[%s1457 + $0x30] sm:$0xff]
                  %1472 = vst [vmem:[%s1458 + $0x30] sm:$0xff] %v1471
                  %v1473 = vld [vmem:[%s1457 + $0x38] sm:$0xff]
                  %1474 = vst [vmem:[%s1458 + $0x38] sm:$0xff] %v1473
                  %v1475 = vld [vmem:[%s1457 + $0x40] sm:$0xff]
                  %1476 = vst [vmem:[%s1458 + $0x40] sm:$0xff] %v1475
                  %v1477 = vld [vmem:[%s1457 + $0x48] sm:$0xff]
                  %1478 = vst [vmem:[%s1458 + $0x48] sm:$0xff] %v1477
                  %v1479 = vld [vmem:[%s1457 + $0x50] sm:$0xff]
                  %1480 = vst [vmem:[%s1458 + $0x50] sm:$0xff] %v1479
                  %v1481 = vld [vmem:[%s1457 + $0x58] sm:$0xff]
                  %1482 = vst [vmem:[%s1458 + $0x58] sm:$0xff] %v1481
                  %v1483 = vld [vmem:[%s1457 + $0x60] sm:$0xff]
                  %1484 = vst [vmem:[%s1458 + $0x60] sm:$0xff] %v1483
                  %v1485 = vld [vmem:[%s1457 + $0x68] sm:$0xff]
                  %1486 = vst [vmem:[%s1458 + $0x68] sm:$0xff] %v1485
                  %v1487 = vld [vmem:[%s1457 + $0x70] sm:$0xff]
                  %1488 = vst [vmem:[%s1458 + $0x70] sm:$0xff] %v1487
                  %v1489 = vld [vmem:[%s1457 + $0x78] sm:$0xff]
                  %1490 = vst [vmem:[%s1458 + $0x78] sm:$0xff] %v1489
                  %v1491 = vld [vmem:[%s1457 + $0x80] sm:$0xff]
                  %1492 = vst [vmem:[%s1458 + $0x80] sm:$0xff] %v1491
                  %v1493 = vld [vmem:[%s1457 + $0x88] sm:$0xff]
                  %1494 = vst [vmem:[%s1458 + $0x88] sm:$0xff] %v1493
                  %v1495 = vld [vmem:[%s1457 + $0x90] sm:$0xff]
                  %1496 = vst [vmem:[%s1458 + $0x90] sm:$0xff] %v1495
                  %v1497 = vld [vmem:[%s1457 + $0x98] sm:$0xff]
                  %1498 = vst [vmem:[%s1458 + $0x98] sm:$0xff] %v1497
                  %v1499 = vld [vmem:[%s1457 + $0xa0] sm:$0xff]
                  %1500 = vst [vmem:[%s1458 + $0xa0] sm:$0xff] %v1499
                  %v1501 = vld [vmem:[%s1457 + $0xa8] sm:$0xff]
                  %1502 = vst [vmem:[%s1458 + $0xa8] sm:$0xff] %v1501
                  %v1503 = vld [vmem:[%s1457 + $0xb0] sm:$0xff]
                  %1504 = vst [vmem:[%s1458 + $0xb0] sm:$0xff] %v1503
                  %v1505 = vld [vmem:[%s1457 + $0xb8] sm:$0xff]
                  %1506 = vst [vmem:[%s1458 + $0xb8] sm:$0xff] %v1505
                  %v1507 = vld [vmem:[%s1457 + $0xc0] sm:$0xff]
                  %1508 = vst [vmem:[%s1458 + $0xc0] sm:$0xff] %v1507
                  %v1509 = vld [vmem:[%s1457 + $0xc8] sm:$0xff]
                  %1510 = vst [vmem:[%s1458 + $0xc8] sm:$0xff] %v1509
                  %v1511 = vld [vmem:[%s1457 + $0xd0] sm:$0xff]
                  %1512 = vst [vmem:[%s1458 + $0xd0] sm:$0xff] %v1511
                  %v1513 = vld [vmem:[%s1457 + $0xd8] sm:$0xff]
                  %1514 = vst [vmem:[%s1458 + $0xd8] sm:$0xff] %v1513
                  %v1515 = vld [vmem:[%s1457 + $0xe0] sm:$0xff]
                  %1516 = vst [vmem:[%s1458 + $0xe0] sm:$0xff] %v1515
                  %v1517 = vld [vmem:[%s1457 + $0xe8] sm:$0xff]
                  %1518 = vst [vmem:[%s1458 + $0xe8] sm:$0xff] %v1517
                  %v1519 = vld [vmem:[%s1457 + $0xf0] sm:$0xff]
                  %1520 = vst [vmem:[%s1458 + $0xf0] sm:$0xff] %v1519
                  %v1521 = vld [vmem:[%s1457 + $0xf8] sm:$0xff]
                  %1522 = vst [vmem:[%s1458 + $0xf8] sm:$0xff] %v1521
                  %v1523 = vld [vmem:[%s1457 + $0x100] sm:$0xff]
                  %1524 = vst [vmem:[%s1458 + $0x100] sm:$0xff] %v1523
                  %v1525 = vld [vmem:[%s1457 + $0x108] sm:$0xff]
                  %1526 = vst [vmem:[%s1458 + $0x108] sm:$0xff] %v1525
                  %v1527 = vld [vmem:[%s1457 + $0x110] sm:$0xff]
                  %1528 = vst [vmem:[%s1458 + $0x110] sm:$0xff] %v1527
                  %v1529 = vld [vmem:[%s1457 + $0x118] sm:$0xff]
                  %1530 = vst [vmem:[%s1458 + $0x118] sm:$0xff] %v1529
                  %v1531 = vld [vmem:[%s1457 + $0x120] sm:$0xff]
                  %1532 = vst [vmem:[%s1458 + $0x120] sm:$0xff] %v1531
                  %v1533 = vld [vmem:[%s1457 + $0x128] sm:$0xff]
                  %1534 = vst [vmem:[%s1458 + $0x128] sm:$0xff] %v1533
                  %v1535 = vld [vmem:[%s1457 + $0x130] sm:$0xff]
                  %1536 = vst [vmem:[%s1458 + $0x130] sm:$0xff] %v1535
                  %v1537 = vld [vmem:[%s1457 + $0x138] sm:$0xff]
                  %1538 = vst [vmem:[%s1458 + $0x138] sm:$0xff] %v1537
                  %v1539 = vld [vmem:[%s1457 + $0x140] sm:$0xff]
                  %1540 = vst [vmem:[%s1458 + $0x140] sm:$0xff] %v1539
                  %v1541 = vld [vmem:[%s1457 + $0x148] sm:$0xff]
                  %1542 = vst [vmem:[%s1458 + $0x148] sm:$0xff] %v1541
                  %v1543 = vld [vmem:[%s1457 + $0x150] sm:$0xff]
                  %1544 = vst [vmem:[%s1458 + $0x150] sm:$0xff] %v1543
                  %v1545 = vld [vmem:[%s1457 + $0x158] sm:$0xff]
                  %1546 = vst [vmem:[%s1458 + $0x158] sm:$0xff] %v1545
                  %v1547 = vld [vmem:[%s1457 + $0x160] sm:$0xff]
                  %1548 = vst [vmem:[%s1458 + $0x160] sm:$0xff] %v1547
                  %v1549 = vld [vmem:[%s1457 + $0x168] sm:$0xff]
                  %1550 = vst [vmem:[%s1458 + $0x168] sm:$0xff] %v1549
                  %v1551 = vld [vmem:[%s1457 + $0x170] sm:$0xff]
                  %1552 = vst [vmem:[%s1458 + $0x170] sm:$0xff] %v1551
                  %v1553 = vld [vmem:[%s1457 + $0x178] sm:$0xff]
                  %1554 = vst [vmem:[%s1458 + $0x178] sm:$0xff] %v1553
                  %v1555 = vld [vmem:[%s1457 + $0x180] sm:$0xff]
                  %1556 = vst [vmem:[%s1458 + $0x180] sm:$0xff] %v1555
                  %v1557 = vld [vmem:[%s1457 + $0x188] sm:$0xff]
                  %1558 = vst [vmem:[%s1458 + $0x188] sm:$0xff] %v1557
                  %v1559 = vld [vmem:[%s1457 + $0x190] sm:$0xff]
                  %1560 = vst [vmem:[%s1458 + $0x190] sm:$0xff] %v1559
                  %v1561 = vld [vmem:[%s1457 + $0x198] sm:$0xff]
                  %1562 = vst [vmem:[%s1458 + $0x198] sm:$0xff] %v1561
                  %v1563 = vld [vmem:[%s1457 + $0x1a0] sm:$0xff]
                  %1564 = vst [vmem:[%s1458 + $0x1a0] sm:$0xff] %v1563
                  %v1565 = vld [vmem:[%s1457 + $0x1a8] sm:$0xff]
                  %1566 = vst [vmem:[%s1458 + $0x1a8] sm:$0xff] %v1565
                  %v1567 = vld [vmem:[%s1457 + $0x1b0] sm:$0xff]
                  %1568 = vst [vmem:[%s1458 + $0x1b0] sm:$0xff] %v1567
                  %v1569 = vld [vmem:[%s1457 + $0x1b8] sm:$0xff]
                  %1570 = vst [vmem:[%s1458 + $0x1b8] sm:$0xff] %v1569
                  %v1571 = vld [vmem:[%s1457 + $0x1c0] sm:$0xff]
                  %1572 = vst [vmem:[%s1458 + $0x1c0] sm:$0xff] %v1571
                  %v1573 = vld [vmem:[%s1457 + $0x1c8] sm:$0xff]
                  %1574 = vst [vmem:[%s1458 + $0x1c8] sm:$0xff] %v1573
                  %v1575 = vld [vmem:[%s1457 + $0x1d0] sm:$0xff]
                  %1576 = vst [vmem:[%s1458 + $0x1d0] sm:$0xff] %v1575
                  %v1577 = vld [vmem:[%s1457 + $0x1d8] sm:$0xff]
                  %1578 = vst [vmem:[%s1458 + $0x1d8] sm:$0xff] %v1577
                  %v1579 = vld [vmem:[%s1457 + $0x1e0] sm:$0xff]
                  %1580 = vst [vmem:[%s1458 + $0x1e0] sm:$0xff] %v1579
                  %v1581 = vld [vmem:[%s1457 + $0x1e8] sm:$0xff]
                  %1582 = vst [vmem:[%s1458 + $0x1e8] sm:$0xff] %v1581
                  %v1583 = vld [vmem:[%s1457 + $0x1f0] sm:$0xff]
                  %1584 = vst [vmem:[%s1458 + $0x1f0] sm:$0xff] %v1583
                  %v1585 = vld [vmem:[%s1457 + $0x1f8] sm:$0xff]
                  %1586 = vst [vmem:[%s1458 + $0x1f8] sm:$0xff] %v1585
                  %s1587 = sadd.s32 1, %s1456
                  %p1588 = scmp.ge.s32.totalorder %s1587, %s1447
                  %s1589 = scalar_select %p1588, 0, %s1587
                  %s1590 = smul.u32 %s1589, 512
                  %s1591 = smul.u32 %s1589, 512
                  %s1592 = scalar_lea.vmem %s1223, %s1590 [#allocation3]
                  %s1593 = scalar_lea.vmem %s1233, %s1591
                $region90: #{decoder_forward.1} parent=84 // loop_footer
                  %s1453 = sadd.s32 %s1451, 1
                $region91: #{decoder_forward.1} parent=84 // loop_footer_branch
                  %1450 = sbr.rel target = $region87
                $region92: #{decoder_forward.1} parent=84 // loop_exit
                  _
                %s1594 = sshrl.u32 %s1446, 6
                %s1595 = sand.u32 %s1446, 63
                %s1596 = smul.u32 %s1594, 64
                %s1597 = smul.u32 128, %s1596
                %s1598 = sshra.s32 %s1597, 4
                %s1599 = scalar_lea.vmem %s1223, %s1598 [#allocation3]
                %s1600 = smul.u32 128, %s1596
                %s1601 = sshra.s32 %s1600, 4
                %s1602 = scalar_lea.vmem %s1233, %s1601
                // While loop
                $region93: #{decoder_forward.1} parent=84 // loop_pre_header
                  _
                $region94: #{decoder_forward.1} parent=84 // loop_header
                  %s1606 = sphi 0, %s1608
                  %p1607 = scmp.ge.s32.totalorder %s1606, %s1595
                  %s1611 = sphi 0, %s1618
                  %s1612 = sphi %s1599, %s1621
                  %s1613 = sphi %s1602, %s1622
                $region95: #{decoder_forward.1} parent=84 // loop_header_branch
                  %1610 = sbr.rel (%p1607) target = $region99
                $region96: #{decoder_forward.1} parent=84 // loop_body
                  %v1614 = vld [vmem:[%s1612] sm:$0xff]
                  %1615 = vst [vmem:[%s1613] sm:$0xff] %v1614
                  %s1616 = sadd.s32 1, %s1611
                  %p1617 = scmp.ge.s32.totalorder %s1616, %s1595
                  %s1618 = scalar_select %p1617, 0, %s1616
                  %s1619 = smul.u32 %s1618, 8
                  %s1620 = smul.u32 %s1618, 8
                  %s1621 = scalar_lea.vmem %s1599, %s1619 [#allocation3]
                  %s1622 = scalar_lea.vmem %s1602, %s1620
                $region97: #{decoder_forward.1} parent=84 // loop_footer
                  %s1608 = sadd.s32 %s1606, 1
                $region98: #{decoder_forward.1} parent=84 // loop_footer_branch
                  %1605 = sbr.rel target = $region94
                $region99: #{decoder_forward.1} parent=84 // loop_exit
                  _
                %s1623 = sshll.u32 1, %s1441
                %s1624 = ssub.s32 %s1623, 1
                loop: start=0, step=1, limit=1
                $region100: #{decoder_forward.1} parent=84 // loop_pre_header
                  _
                $region101: #{decoder_forward.1} parent=84 // loop_header
                  %s1626 = sphi 0, %s1630
                  %p1627 = scmp.ge.s32.totalorder %s1626, 1
                  %s1631 = sphi %s1443, %s1443
                  %s1632 = sphi %s1445, %s1445
                $region102: #{decoder_forward.1} parent=84 // loop_header_branch
                  %1629 = sbr.rel (%p1627) target = $region106
                $region103: #{decoder_forward.1} parent=84 // loop_body
                  %v1633 = vld [vmem:[%s1631] sm:%s1624]
                  %1634 = vst [vmem:[%s1632] sm:%s1624] %v1633
                $region104: #{decoder_forward.1} parent=84 // loop_footer
                  %s1630 = sadd.s32 1, %s1626
                $region105: #{decoder_forward.1} parent=84 // loop_footer_branch
                  %1625 = sbr.rel target = $region101
                $region106: #{decoder_forward.1} parent=84 // loop_exit
                  _
              $region85: #{decoder_forward.1} parent=51 // pred_fallthru
                _
            $region52: #{decoder_forward.1} parent=47 // pred_fallthru
              _
            // Predicated region
            $region53: #{decoder_forward.1} parent=47 // pred_check
              %p1241 = pneg %p1237
            $region54: #{decoder_forward.1} parent=47 // pred_check_branch
              %1243 = sbr.rel (%p1241) target = $region56
            $region55: #{decoder_forward.1} parent=47 // pred_region
              %s1244 = sshll.u32 1, %s1230
              %s1245 = ssub.s32 %s1244, 1
              loop: start=0, step=1, limit=1
              $region57: #{decoder_forward.1} parent=55 // loop_pre_header
                _
              $region58: #{decoder_forward.1} parent=55 // loop_header
                %s1247 = sphi 0, %s1251
                %p1248 = scmp.ge.s32.totalorder %s1247, 1
                %s1252 = sphi %s1223, %s1223
                %s1253 = sphi %s1233, %s1233
              $region59: #{decoder_forward.1} parent=55 // loop_header_branch
                %1250 = sbr.rel (%p1248) target = $region63
              $region60: #{decoder_forward.1} parent=55 // loop_body
                %v1254 = vld [vmem:[%s1252] sm:%s1245]
                %1255 = vst [vmem:[%s1253] sm:%s1245] %v1254
              $region61: #{decoder_forward.1} parent=55 // loop_footer
                %s1251 = sadd.s32 1, %s1247
              $region62: #{decoder_forward.1} parent=55 // loop_footer_branch
                %1246 = sbr.rel target = $region58
              $region63: #{decoder_forward.1} parent=55 // loop_exit
                _
            $region56: #{decoder_forward.1} parent=47 // pred_fallthru
              _
          $region48: #{decoder_forward.1} parent=43 // pred_fallthru
            _
          %1635 = vnop
        $region44: #{decoder_forward.1} parent=39 // pred_fallthru
          _
      $region40: #{decoder_forward.1} parent=5 // pred_fallthru
        _
      %p1636 = scmp.le.s32.totalorder 2, %s13
      // Predicated region
      $region107: #{decoder_forward.1} parent=5 // pred_check
        %p1637 = pneg %p1636
      $region108: #{decoder_forward.1} parent=5 // pred_check_branch
        %1639 = sbr.rel (%p1637) target = $region110
      $region109: #{decoder_forward.1} parent=5 // pred_region
        %s1640 = ssub.s32 %s13, 2
        // Predicated region
        $region111: #{decoder_forward.1} parent=109 // pred_check
          %p1641 = pneg %p152
        $region112: #{decoder_forward.1} parent=109 // pred_check_branch
          %1643 = sbr.rel (%p1641) target = $region114
        $region113: #{decoder_forward.1} parent=109 // pred_region
          %s1644 = sand.u32 %s137, 1
          %s1645 = sand.u32 %s137, 1
          %s1646 = smul.addr %s1645, 2
          %s1647 = scalar_lea.vmem [#allocation3], %s1646
        $region114: #{decoder_forward.1} parent=109 // pred_fallthru
          _
      $region110: #{decoder_forward.1} parent=5 // pred_fallthru
        _
    $region6: #{decoder_forward.1} parent=1 // loop_footer
      %s17 = sadd.s32 1, %s13
    $region7: #{decoder_forward.1} parent=1 // loop_footer_branch
      %12 = sbr.rel target = $region3
    $region8: #{decoder_forward.1} parent=1 // loop_exit
      _

</llo_original>
